<compile_context>
chip_gen: v6e
topology: v6e:2x2x1
jax: 0.10.0
libtpu: 0.0.40
codegen_flags: <defaults>
</compile_context>

<pallas_src>
import functools
import math

import jax
import jax.numpy as jnp
from jax.experimental import pallas as pl
from jax.experimental.pallas import tpu as pltpu


_VMEM_LIMIT = 32 * 1024 * 1024  # conservative budget (fits v7x's 64 MiB VMEM)


def _pick(n, pref):
    """Tile size: `pref` if it divides n, else the full dimension."""
    return n if (n <= pref or n % pref != 0) else pref


# ----------------------------------------------------------------------------
# Tiled matmul kernels (bf16 MXU inputs, f32 accumulation)
# ----------------------------------------------------------------------------
def _matmul_kernel(a_ref, b_ref, o_ref, acc_ref):
    @pl.when(pl.program_id(2) == 0)
    def _():
        acc_ref[...] = jnp.zeros_like(acc_ref)

    acc_ref[...] += jnp.dot(a_ref[...], b_ref[...],
                            preferred_element_type=jnp.float32)

    @pl.when(pl.program_id(2) == pl.num_programs(2) - 1)
    def _():
        o_ref[...] = acc_ref[...].astype(o_ref.dtype)


def _matmul_res_kernel(a_ref, b_ref, r_ref, o_ref, acc_ref):
    # Residual is folded into the accumulator init -> fused residual add.
    @pl.when(pl.program_id(2) == 0)
    def _():
        acc_ref[...] = r_ref[...].astype(jnp.float32)

    acc_ref[...] += jnp.dot(a_ref[...], b_ref[...],
                            preferred_element_type=jnp.float32)

    @pl.when(pl.program_id(2) == pl.num_programs(2) - 1)
    def _():
        o_ref[...] = acc_ref[...].astype(o_ref.dtype)


def matmul(a, b, *, out_dtype=jnp.float32, residual=None,
           tm=256, tn=512, tk=512):
    M, K = a.shape
    _, N = b.shape
    bm, bn, bk = _pick(M, tm), _pick(N, tn), _pick(K, tk)
    grid = (M // bm, N // bn, K // bk)

    a_spec = pl.BlockSpec((bm, bk), lambda i, j, k: (i, k))
    b_spec = pl.BlockSpec((bk, bn), lambda i, j, k: (k, j))
    o_spec = pl.BlockSpec((bm, bn), lambda i, j, k: (i, j))
    scratch = [pltpu.VMEM((bm, bn), jnp.float32)]
    cparams = pltpu.CompilerParams(
        dimension_semantics=("parallel", "parallel", "arbitrary"),
        vmem_limit_bytes=_VMEM_LIMIT)

    if residual is None:
        return pl.pallas_call(
            _matmul_kernel,
            out_shape=jax.ShapeDtypeStruct((M, N), out_dtype),
            grid=grid, in_specs=[a_spec, b_spec], out_specs=o_spec,
            scratch_shapes=scratch, compiler_params=cparams,
        )(a, b)

    r_spec = pl.BlockSpec((bm, bn), lambda i, j, k: (i, j))
    return pl.pallas_call(
        _matmul_res_kernel,
        out_shape=jax.ShapeDtypeStruct((M, N), out_dtype),
        grid=grid, in_specs=[a_spec, b_spec, r_spec], out_specs=o_spec,
        scratch_shapes=scratch, compiler_params=cparams,
    )(a, b, residual)


# ----------------------------------------------------------------------------
# Row-tiled elementwise kernels (f32 math, bf16 outputs for the MXU path)
# ----------------------------------------------------------------------------
def _rmsnorm_kernel(eps, x_ref, w_ref, o_ref):
    x = x_ref[...]                                   # (bm, D) f32
    var = jnp.mean(x * x, axis=-1, keepdims=True)
    o_ref[...] = (x * jax.lax.rsqrt(var + eps) * w_ref[...]).astype(o_ref.dtype)


def rmsnorm(x, w, eps):
    M, D = x.shape
    bm = _pick(M, 256)
    return pl.pallas_call(
        functools.partial(_rmsnorm_kernel, eps),
        out_shape=jax.ShapeDtypeStruct((M, D), jnp.bfloat16),
        grid=(M // bm,),
        in_specs=[pl.BlockSpec((bm, D), lambda i: (i, 0)),
                  pl.BlockSpec((1, D), lambda i: (0, 0))],
        out_specs=pl.BlockSpec((bm, D), lambda i: (i, 0)),
        compiler_params=pltpu.CompilerParams(
            dimension_semantics=("parallel",), vmem_limit_bytes=_VMEM_LIMIT),
    )(x, w)


def _swiglu_kernel(hidden, gu_ref, o_ref):
    gu = gu_ref[...]                                 # (bm, 2H) f32
    g = gu[:, :hidden]
    u = gu[:, hidden:]
    o_ref[...] = (g * jax.nn.sigmoid(g) * u).astype(o_ref.dtype)


def swiglu(gu, hidden):
    M, H2 = gu.shape
    bm = _pick(M, 256)
    return pl.pallas_call(
        functools.partial(_swiglu_kernel, hidden),
        out_shape=jax.ShapeDtypeStruct((M, hidden), jnp.bfloat16),
        grid=(M // bm,),
        in_specs=[pl.BlockSpec((bm, H2), lambda i: (i, 0))],
        out_specs=pl.BlockSpec((bm, hidden), lambda i: (i, 0)),
        compiler_params=pltpu.CompilerParams(
            dimension_semantics=("parallel",), vmem_limit_bytes=_VMEM_LIMIT),
    )(gu)


# ----------------------------------------------------------------------------
# Attention: grid over (batch, head); RoPE + causal softmax + PV per head
# ----------------------------------------------------------------------------
def _attention_kernel(head_dim, scale, sp_ref,
                      q_ref, k_ref, v_ref, cos_ref, sin_ref, o_ref):
    f32 = jnp.float32
    bf16 = jnp.bfloat16
    hd2 = head_dim // 2
    S = q_ref.shape[2]

    cos = cos_ref[...]                               # (S, hd) f32
    sin = sin_ref[...]                               # (S, hd) f32, sign-folded

    def rope(x_ref_slice):
        x = x_ref_slice.astype(f32)                  # (S, hd)
        xr = jnp.concatenate([x[:, hd2:], x[:, :hd2]], axis=-1)
        return x * cos + xr * sin

    q = rope(q_ref[0, 0]).astype(bf16)
    k = rope(k_ref[0, 0]).astype(bf16)

    # scores = q @ k^T  (MXU, f32 accumulate)
    s = jax.lax.dot_general(q, k, (((1,), (1,)), ((), ())),
                            preferred_element_type=f32) * scale

    # causal mask built in-kernel (no S x S mask DMA); finite negative, not -inf
    start = sp_ref[0]
    q_pos = jax.lax.broadcasted_iota(jnp.int32, (S, S), 0) + start
    k_pos = jax.lax.broadcasted_iota(jnp.int32, (S, S), 1)
    s = jnp.where(k_pos <= q_pos, s, -1e30)

    # softmax in f32, EUP approx reciprocal for the denominator
    s = s - jnp.max(s, axis=-1, keepdims=True)
    p = jnp.exp(s)
    p = p * pl.reciprocal(jnp.sum(p, axis=-1, keepdims=True), approx=True)

    o = jnp.dot(p.astype(bf16), v_ref[0, 0], preferred_element_type=f32)
    o_ref[0, 0] = o.astype(o_ref.dtype)


def run_attention(qkv, cos, sin, start_arr, *, B, S, n_heads, head_dim):
    D = n_heads * head_dim
    # (M, 3D) -> (3, B, H, S, hd)   (layout plumbing in the XLA wrapper)
    t = jnp.transpose(qkv.reshape(B, S, 3, n_heads, head_dim), (2, 0, 3, 1, 4))
    q, k, v = t[0], t[1], t[2]

    blk = pl.BlockSpec((1, 1, S, head_dim), lambda b, h, sp: (b, h, 0, 0))
    cs_blk = pl.BlockSpec((S, head_dim), lambda b, h, sp: (0, 0))

    out = pl.pallas_call(
        functools.partial(_attention_kernel, head_dim, 1.0 / math.sqrt(head_dim)),
        out_shape=jax.ShapeDtypeStruct((B, n_heads, S, head_dim), jnp.bfloat16),
        grid_spec=pltpu.PrefetchScalarGridSpec(
            num_scalar_prefetch=1,
            grid=(B, n_heads),
            in_specs=[blk, blk, blk, cs_blk, cs_blk],
            out_specs=blk),
        compiler_params=pltpu.CompilerParams(
            dimension_semantics=("parallel", "parallel"),
            vmem_limit_bytes=_VMEM_LIMIT),
    )(start_arr, q, k, v, cos, sin)

    return jnp.transpose(out, (0, 2, 1, 3)).reshape(B * S, D)


# ----------------------------------------------------------------------------
# Parameter setup (deterministic synthetic weights, bf16 storage)
# ----------------------------------------------------------------------------
def precompute_freqs_cos_sin(head_dim, end, theta=10000.0):
    freqs = 1.0 / (theta ** (jnp.arange(0, head_dim, 2, dtype=jnp.float32)[
        : head_dim // 2] / head_dim))
    t = jnp.arange(end, dtype=jnp.float32)
    ang = jnp.outer(t, freqs)                        # (end, head_dim//2)
    return jnp.cos(ang), jnp.sin(ang)


def _rope_perm(n_heads, head_dim):
    # per head: evens then odds -> half-split RoPE layout
    per_head = jnp.concatenate([jnp.arange(0, head_dim, 2),
                                jnp.arange(1, head_dim, 2)])
    return jnp.concatenate([h * head_dim + per_head for h in range(n_heads)])


def init_params(key, *, vocab_size, dim, n_layers, n_heads, hidden_dim):
    head_dim = dim // n_heads
    perm = _rope_perm(n_heads, head_dim)

    def normal(k, shape):
        return 0.02 * jax.random.normal(k, shape, dtype=jnp.float32)

    keys = iter(jax.random.split(key, 2 + n_layers * 7))
    params = {
        'emb': normal(next(keys), (vocab_size, dim)),              # f32
        'norm': jnp.ones((1, dim), jnp.float32),
        'w_out': normal(next(keys), (dim, vocab_size)).astype(jnp.bfloat16),
        'layers': [],
    }
    for _ in range(n_layers):
        wq = normal(next(keys), (dim, dim))[:, perm]
        wk = normal(next(keys), (dim, dim))[:, perm]
        wv = normal(next(keys), (dim, dim))
        wo = normal(next(keys), (dim, dim))
        w1 = normal(next(keys), (dim, hidden_dim))
        w3 = normal(next(keys), (dim, hidden_dim))
        w2 = normal(next(keys), (hidden_dim, dim))
        params['layers'].append({
            'wqkv': jnp.concatenate([wq, wk, wv], axis=1).astype(jnp.bfloat16),
            'wo': wo.astype(jnp.bfloat16),
            'w13': jnp.concatenate([w1, w3], axis=1).astype(jnp.bfloat16),
            'w2': w2.astype(jnp.bfloat16),
            'attn_norm': jnp.ones((1, dim), jnp.float32),
            'ffn_norm': jnp.ones((1, dim), jnp.float32),
        })
    return params


# ----------------------------------------------------------------------------
# Full forward pass (single jit; start_pos stays on-device)
# ----------------------------------------------------------------------------
@functools.partial(jax.jit,
                   static_argnames=('n_heads', 'head_dim', 'max_seq_len', 'eps'))
def transformer_forward(params, tokens, attention_mask, *,
                        n_heads, head_dim, max_seq_len, eps=1e-5):
    B, S = tokens.shape
    D = n_heads * head_dim

    # torch: start_pos = int(argmax(attention_mask, dim=-1).item())
    # kept as a traced scalar (no device->host sync) and fed to the kernels
    # via scalar prefetch.
    start_pos = jnp.argmax(attention_mask[0]).astype(jnp.int32)
    start_arr = start_pos.reshape(1)

    h = params['emb'][tokens].reshape(B * S, D)                     # (M, D) f32

    cos_all, sin_all = precompute_freqs_cos_sin(head_dim, max_seq_len * 2)
    cos = jax.lax.dynamic_slice_in_dim(cos_all, start_pos, S, axis=0)
    sin = jax.lax.dynamic_slice_in_dim(sin_all, start_pos, S, axis=0)
    cos = jnp.concatenate([cos, cos], axis=-1)                      # (S, hd)
    sin = jnp.concatenate([-sin, sin], axis=-1)   # rotate-half sign folded in

    for layer in params['layers']:
        # attention sub-layer
        xn = rmsnorm(h, layer['attn_norm'], eps)                     # bf16
        qkv = matmul(xn, layer['wqkv'], out_dtype=jnp.bfloat16)      # (M, 3D)
        attn = run_attention(qkv, cos, sin, start_arr,
                             B=B, S=S, n_heads=n_heads, head_dim=head_dim)
        h = matmul(attn, layer['wo'], residual=h)                    # fused +res

        # SwiGLU feed-forward sub-layer
        hn = rmsnorm(h, layer['ffn_norm'], eps)
        gu = matmul(hn, layer['w13'])                                # (M, 2H) f32
        act = swiglu(gu, layer['w2'].shape[0])                       # (M, H) bf16
        h = matmul(act, layer['w2'], residual=h)                     # fused +res

    # final norm + vocab projection of the last token only
    h_last = h.reshape(B, S, D)[:, -1, :]                            # (B, D)
    nl = rmsnorm(h_last, params['norm'], eps)
    logits = matmul(nl, params['w_out'])                             # (B, V) f32
    return logits


# ----------------------------------------------------------------------------
if __name__ == "__main__":
    # ModelArgs (small, synthetic): dim=32, n_heads=4, n_layers=2, vocab=64,
    # max_seq_len=16, norm_eps=1e-5, multiple_of=32 -> ffn hidden_dim=96.
    B, S = 2, 8
    dim, n_heads, n_layers, vocab_size = 32, 4, 2, 64
    max_seq_len, multiple_of = 16, 32
    head_dim = dim // n_heads
    hidden_dim = int(2 * (4 * dim) / 3)
    hidden_dim = multiple_of * ((hidden_dim + multiple_of - 1) // multiple_of)

    root = jax.random.PRNGKey(0)
    kp, kt = jax.random.split(root)
    params = init_params(kp, vocab_size=vocab_size, dim=dim, n_layers=n_layers,
                         n_heads=n_heads, hidden_dim=hidden_dim)

    tokens = jax.random.randint(kt, (B, S), 0, vocab_size, dtype=jnp.int32)
    attention_mask = jnp.ones((B, S), dtype=jnp.int32)

    logits = transformer_forward(params, tokens, attention_mask,
                                 n_heads=n_heads, head_dim=head_dim,
                                 max_seq_len=max_seq_len, eps=1e-5)
    logits = jax.block_until_ready(logits)

    assert logits.shape == (B, vocab_size) and logits.dtype == jnp.float32
    assert bool(jnp.all(jnp.isfinite(logits)))
    print("KERNEL_OK")
</pallas_src>

<mosaic_0001>
module attributes {stable_mosaic.version = 11 : i64} {
  func.func @_rmsnorm_kernel(%arg0: i32, %arg1: memref<16x32xf32, #tpu.memory_space<vmem>>, %arg2: memref<1x32xf32, #tpu.memory_space<vmem>>, %arg3: memref<16x32xbf16, #tpu.memory_space<vmem>>) attributes {dimension_semantics = [#tpu.dimension_semantics<parallel>], iteration_bounds = array<i64: 1>, scalar_prefetch = 0 : i64, scratch_operands = 0 : i64, tpu.core_type = #tpu.core_type<tc>, window_params = [{transform_indices = @transform_0, window_bounds = array<i64: 16, 32>}, {pipeline_mode = #tpu.pipeline_mode<synchronous>, transform_indices = @transform_1, window_bounds = array<i64: 1, 32>}, {transform_indices = @transform_2, window_bounds = array<i64: 16, 32>}]} {
    %c0 = arith.constant 0 : index
    %c0_0 = arith.constant 0 : index
    %0 = vector.load %arg1[%c0, %c0_0] : memref<16x32xf32, #tpu.memory_space<vmem>>, vector<16x32xf32>
    %1 = arith.mulf %0, %0 : vector<16x32xf32>
    %cst = arith.constant dense<0.000000e+00> : vector<16xf32>
    %2 = vector.multi_reduction <add>, %1, %cst [1] : vector<16x32xf32> to vector<16xf32>
    %3 = vector.shape_cast %2 : vector<16xf32> to vector<16x1xf32>
    %cst_1 = arith.constant 3.200000e+01 : f32
    %4 = vector.broadcast %cst_1 : f32 to vector<16x1xf32>
    %5 = arith.divf %3, %4 : vector<16x1xf32>
    %cst_2 = arith.constant 9.99999974E-6 : f32
    %6 = vector.broadcast %cst_2 : f32 to vector<16x1xf32>
    %7 = arith.addf %5, %6 : vector<16x1xf32>
    %8 = math.rsqrt %7 : vector<16x1xf32>
    %9 = vector.broadcast %8 : vector<16x1xf32> to vector<16x32xf32>
    %10 = arith.mulf %0, %9 : vector<16x32xf32>
    %c0_3 = arith.constant 0 : index
    %c0_4 = arith.constant 0 : index
    %11 = vector.load %arg2[%c0_3, %c0_4] : memref<1x32xf32, #tpu.memory_space<vmem>>, vector<1x32xf32>
    %12 = vector.broadcast %11 : vector<1x32xf32> to vector<16x32xf32>
    %13 = arith.mulf %10, %12 : vector<16x32xf32>
    %14 = arith.truncf %13 : vector<16x32xf32> to vector<16x32xbf16>
    %c0_5 = arith.constant 0 : index
    %c0_6 = arith.constant 0 : index
    %15 = vector.load %arg3[%c0_5, %c0_6] : memref<16x32xbf16, #tpu.memory_space<vmem>>, vector<16x32xbf16>
    tpu.vector_store %arg3[%c0_5, %c0_6], %14 {strides = array<i32>} : memref<16x32xbf16, #tpu.memory_space<vmem>>, vector<16x32xbf16>,
    return
  }
  func.func @transform_0(%arg0: i32) -> (i32, i32) {
    %c0_i32 = arith.constant 0 : i32
    %c0_i32_0 = arith.constant 0 : i32
    return %arg0, %c0_i32 : i32, i32
  }
  func.func @transform_1(%arg0: i32) -> (i32, i32) {
    %c0_i32 = arith.constant 0 : i32
    %c0_i32_0 = arith.constant 0 : i32
    %c0_i32_1 = arith.constant 0 : i32
    return %c0_i32, %c0_i32_0 : i32, i32
  }
  func.func @transform_2(%arg0: i32) -> (i32, i32) {
    %c0_i32 = arith.constant 0 : i32
    %c0_i32_0 = arith.constant 0 : i32
    return %arg0, %c0_i32 : i32, i32
  }
}

module attributes {stable_mosaic.version = 11 : i64} {
  func.func @_matmul_kernel(%arg0: i32, %arg1: i32, %arg2: i32, %arg3: memref<16x32xbf16, #tpu.memory_space<vmem>>, %arg4: memref<32x96xbf16, #tpu.memory_space<vmem>>, %arg5: memref<16x96xbf16, #tpu.memory_space<vmem>>, %arg6: memref<16x96xf32, #tpu.memory_space<vmem>>) attributes {dimension_semantics = [#tpu.dimension_semantics<parallel>, #tpu.dimension_semantics<parallel>, #tpu.dimension_semantics<arbitrary>], iteration_bounds = array<i64: 1, 1, 1>, scalar_prefetch = 0 : i64, scratch_operands = 1 : i64, tpu.core_type = #tpu.core_type<tc>, window_params = [{transform_indices = @transform_0, window_bounds = array<i64: 16, 32>}, {transform_indices = @transform_1, window_bounds = array<i64: 32, 96>}, {transform_indices = @transform_2, window_bounds = array<i64: 16, 96>}]} {
    %c0_i32 = arith.constant 0 : i32
    %0 = arith.cmpi eq, %arg2, %c0_i32 : i32
    %1 = arith.extui %0 : i1 to i32
    %c0_i32_0 = arith.constant 0 : i32
    %2 = arith.cmpi ne, %1, %c0_i32_0 : i32
    scf.if %2 {
      %cst_10 = arith.constant 0.000000e+00 : f32
      %12 = vector.broadcast %cst_10 : f32 to vector<16x96xf32>
      %c0_11 = arith.constant 0 : index
      %c0_12 = arith.constant 0 : index
      %13 = vector.load %arg6[%c0_11, %c0_12] : memref<16x96xf32, #tpu.memory_space<vmem>>, vector<16x96xf32>
      tpu.vector_store %arg6[%c0_11, %c0_12], %12 {strides = array<i32>} : memref<16x96xf32, #tpu.memory_space<vmem>>, vector<16x96xf32>,
    } else {
    }
    %c0 = arith.constant 0 : index
    %c0_1 = arith.constant 0 : index
    %3 = vector.load %arg6[%c0, %c0_1] : memref<16x96xf32, #tpu.memory_space<vmem>>, vector<16x96xf32>
    %c0_2 = arith.constant 0 : index
    %c0_3 = arith.constant 0 : index
    %4 = vector.load %arg3[%c0_2, %c0_3] : memref<16x32xbf16, #tpu.memory_space<vmem>>, vector<16x32xbf16>
    %c0_4 = arith.constant 0 : index
    %c0_5 = arith.constant 0 : index
    %5 = vector.load %arg4[%c0_4, %c0_5] : memref<32x96xbf16, #tpu.memory_space<vmem>>, vector<32x96xbf16>
    %cst = arith.constant dense<0.000000e+00> : vector<16x96xf32>
    %6 = tpu.matmul %4, %5, %cst {dimension_numbers = #tpu.dot_dimension_numbers<[1], [0], [0], [1], [0, 0, 1, 1], [], []>} : vector<16x32xbf16>, vector<32x96xbf16>, vector<16x96xf32> -> vector<16x96xf32>
    %7 = arith.addf %3, %6 : vector<16x96xf32>
    %c0_6 = arith.constant 0 : index
    %c0_7 = arith.constant 0 : index
    %8 = vector.load %arg6[%c0_6, %c0_7] : memref<16x96xf32, #tpu.memory_space<vmem>>, vector<16x96xf32>
    tpu.vector_store %arg6[%c0_6, %c0_7], %7 {strides = array<i32>} : memref<16x96xf32, #tpu.memory_space<vmem>>, vector<16x96xf32>,
    %c0_i32_8 = arith.constant 0 : i32
    %9 = arith.cmpi eq, %arg2, %c0_i32_8 : i32
    %10 = arith.extui %9 : i1 to i32
    %c0_i32_9 = arith.constant 0 : i32
    %11 = arith.cmpi ne, %10, %c0_i32_9 : i32
    scf.if %11 {
      %c0_10 = arith.constant 0 : index
      %c0_11 = arith.constant 0 : index
      %12 = vector.load %arg6[%c0_10, %c0_11] : memref<16x96xf32, #tpu.memory_space<vmem>>, vector<16x96xf32>
      %13 = arith.truncf %12 : vector<16x96xf32> to vector<16x96xbf16>
      %c0_12 = arith.constant 0 : index
      %c0_13 = arith.constant 0 : index
      %14 = vector.load %arg5[%c0_12, %c0_13] : memref<16x96xbf16, #tpu.memory_space<vmem>>, vector<16x96xbf16>
      tpu.vector_store %arg5[%c0_12, %c0_13], %13 {strides = array<i32>} : memref<16x96xbf16, #tpu.memory_space<vmem>>, vector<16x96xbf16>,
    } else {
    }
    return
  }
  func.func @transform_0(%arg0: i32, %arg1: i32, %arg2: i32) -> (i32, i32) {
    %c0_i32 = arith.constant 0 : i32
    return %arg0, %arg2 : i32, i32
  }
  func.func @transform_1(%arg0: i32, %arg1: i32, %arg2: i32) -> (i32, i32) {
    %c0_i32 = arith.constant 0 : i32
    return %arg2, %arg1 : i32, i32
  }
  func.func @transform_2(%arg0: i32, %arg1: i32, %arg2: i32) -> (i32, i32) {
    %c0_i32 = arith.constant 0 : i32
    return %arg0, %arg1 : i32, i32
  }
}

module attributes {stable_mosaic.version = 11 : i64} {
  func.func @_attention_kernel(%arg0: i32, %arg1: i32, %arg2: memref<1xi32, #tpu.memory_space<smem>>, %arg3: memref<1x1x8x8xbf16, #tpu.memory_space<vmem>>, %arg4: memref<1x1x8x8xbf16, #tpu.memory_space<vmem>>, %arg5: memref<1x1x8x8xbf16, #tpu.memory_space<vmem>>, %arg6: memref<8x8xf32, #tpu.memory_space<vmem>>, %arg7: memref<8x8xf32, #tpu.memory_space<vmem>>, %arg8: memref<1x1x8x8xbf16, #tpu.memory_space<vmem>>) attributes {dimension_semantics = [#tpu.dimension_semantics<parallel>, #tpu.dimension_semantics<parallel>], iteration_bounds = array<i64: 2, 4>, scalar_prefetch = 1 : i64, scratch_operands = 0 : i64, tpu.core_type = #tpu.core_type<tc>, window_params = [{transform_indices = @transform_0, window_bounds = array<i64: 1, 1, 8, 8>}, {transform_indices = @transform_1, window_bounds = array<i64: 1, 1, 8, 8>}, {transform_indices = @transform_2, window_bounds = array<i64: 1, 1, 8, 8>}, {pipeline_mode = #tpu.pipeline_mode<synchronous>, transform_indices = @transform_3, window_bounds = array<i64: 8, 8>}, {pipeline_mode = #tpu.pipeline_mode<synchronous>, transform_indices = @transform_4, window_bounds = array<i64: 8, 8>}, {transform_indices = @transform_5, window_bounds = array<i64: 1, 1, 8, 8>}]} {
    %c0 = arith.constant 0 : index
    %c0_0 = arith.constant 0 : index
    %0 = vector.load %arg6[%c0, %c0_0] : memref<8x8xf32, #tpu.memory_space<vmem>>, vector<8x8xf32>
    %c0_1 = arith.constant 0 : index
    %c0_2 = arith.constant 0 : index
    %1 = vector.load %arg7[%c0_1, %c0_2] : memref<8x8xf32, #tpu.memory_space<vmem>>, vector<8x8xf32>
    %c0_3 = arith.constant 0 : index
    %c0_4 = arith.constant 0 : index
    %c0_5 = arith.constant 0 : index
    %c0_6 = arith.constant 0 : index
    %2 = vector.load %arg3[%c0_3, %c0_4, %c0_5, %c0_6] : memref<1x1x8x8xbf16, #tpu.memory_space<vmem>>, vector<1x1x8x8xbf16>
    %3 = vector.shape_cast %2 : vector<1x1x8x8xbf16> to vector<8x8xbf16>
    %4 = arith.extf %3 : vector<8x8xbf16> to vector<8x8xf32>
    %5 = vector.extract_strided_slice %4 {offsets = [0, 4], sizes = [8, 4], strides = [1, 1]} : vector<8x8xf32> to vector<8x4xf32>
    %6 = vector.extract_strided_slice %4 {offsets = [0, 0], sizes = [8, 4], strides = [1, 1]} : vector<8x8xf32> to vector<8x4xf32>
    %7 = tpu.concatenate %5, %6 in 1 : vector<8x4xf32>, vector<8x4xf32> -> vector<8x8xf32>
    %8 = arith.mulf %4, %0 : vector<8x8xf32>
    %9 = arith.mulf %7, %1 : vector<8x8xf32>
    %10 = arith.addf %8, %9 : vector<8x8xf32>
    %11 = arith.truncf %10 : vector<8x8xf32> to vector<8x8xbf16>
    %c0_7 = arith.constant 0 : index
    %c0_8 = arith.constant 0 : index
    %c0_9 = arith.constant 0 : index
    %c0_10 = arith.constant 0 : index
    %12 = vector.load %arg4[%c0_7, %c0_8, %c0_9, %c0_10] : memref<1x1x8x8xbf16, #tpu.memory_space<vmem>>, vector<1x1x8x8xbf16>
    %13 = vector.shape_cast %12 : vector<1x1x8x8xbf16> to vector<8x8xbf16>
    %14 = arith.extf %13 : vector<8x8xbf16> to vector<8x8xf32>
    %15 = vector.extract_strided_slice %14 {offsets = [0, 4], sizes = [8, 4], strides = [1, 1]} : vector<8x8xf32> to vector<8x4xf32>
    %16 = vector.extract_strided_slice %14 {offsets = [0, 0], sizes = [8, 4], strides = [1, 1]} : vector<8x8xf32> to vector<8x4xf32>
    %17 = tpu.concatenate %15, %16 in 1 : vector<8x4xf32>, vector<8x4xf32> -> vector<8x8xf32>
    %18 = arith.mulf %14, %0 : vector<8x8xf32>
    %19 = arith.mulf %17, %1 : vector<8x8xf32>
    %20 = arith.addf %18, %19 : vector<8x8xf32>
    %21 = arith.truncf %20 : vector<8x8xf32> to vector<8x8xbf16>
    %cst = arith.constant dense<0.000000e+00> : vector<8x8xf32>
    %22 = tpu.matmul %11, %21, %cst {dimension_numbers = #tpu.dot_dimension_numbers<[1], [1], [0], [0], [0, 0, 1, 0], [], []>} : vector<8x8xbf16>, vector<8x8xbf16>, vector<8x8xf32> -> vector<8x8xf32>
    %cst_11 = arith.constant 0.353553385 : f32
    %23 = vector.broadcast %cst_11 : f32 to vector<8x8xf32>
    %24 = arith.mulf %22, %23 : vector<8x8xf32>
    %c0_12 = arith.constant 0 : index
    %25 = memref.load %arg2[%c0_12] : memref<1xi32, #tpu.memory_space<smem>>
    %26 = tpu.iota {dimensions = array<i32: 0>} : vector<8x8xi32>
    %27 = vector.broadcast %25 : i32 to vector<8x8xi32>
    %28 = arith.addi %26, %27 : vector<8x8xi32>
    %29 = tpu.iota {dimensions = array<i32: 1>} : vector<8x8xi32>
    %30 = arith.cmpi sle, %29, %28 : vector<8x8xi32>
    %cst_13 = arith.constant -1.000000e+30 : f32
    %31 = vector.broadcast %cst_13 : f32 to vector<8x8xf32>
    %32 = arith.select %30, %24, %31 : vector<8x8xi1>, vector<8x8xf32>
    %cst_14 = arith.constant dense<0xFF800000> : vector<8xf32>
    %33 = vector.multi_reduction <maximumf>, %32, %cst_14 [1] : vector<8x8xf32> to vector<8xf32>
    %34 = vector.shape_cast %33 : vector<8xf32> to vector<8x1xf32>
    %35 = vector.broadcast %34 : vector<8x1xf32> to vector<8x8xf32>
    %36 = arith.subf %32, %35 : vector<8x8xf32>
    %37 = math.exp %36 : vector<8x8xf32>
    %cst_15 = arith.constant dense<0.000000e+00> : vector<8xf32>
    %38 = vector.multi_reduction <add>, %37, %cst_15 [1] : vector<8x8xf32> to vector<8xf32>
    %39 = vector.shape_cast %38 : vector<8xf32> to vector<8x1xf32>
    %40 = tpu.reciprocal %39 {approx = true} : vector<8x1xf32> -> vector<8x1xf32>
    %41 = vector.broadcast %40 : vector<8x1xf32> to vector<8x8xf32>
    %42 = arith.mulf %37, %41 : vector<8x8xf32>
    %43 = arith.truncf %42 : vector<8x8xf32> to vector<8x8xbf16>
    %c0_16 = arith.constant 0 : index
    %c0_17 = arith.constant 0 : index
    %c0_18 = arith.constant 0 : index
    %c0_19 = arith.constant 0 : index
    %44 = vector.load %arg5[%c0_16, %c0_17, %c0_18, %c0_19] : memref<1x1x8x8xbf16, #tpu.memory_space<vmem>>, vector<1x1x8x8xbf16>
    %45 = vector.shape_cast %44 : vector<1x1x8x8xbf16> to vector<8x8xbf16>
    %cst_20 = arith.constant dense<0.000000e+00> : vector<8x8xf32>
    %46 = tpu.matmul %43, %45, %cst_20 {dimension_numbers = #tpu.dot_dimension_numbers<[1], [0], [0], [1], [0, 0, 1, 1], [], []>} : vector<8x8xbf16>, vector<8x8xbf16>, vector<8x8xf32> -> vector<8x8xf32>
    %47 = arith.truncf %46 : vector<8x8xf32> to vector<8x8xbf16>
    %c0_21 = arith.constant 0 : index
    %c0_22 = arith.constant 0 : index
    %c0_23 = arith.constant 0 : index
    %c0_24 = arith.constant 0 : index
    %48 = vector.load %arg8[%c0_21, %c0_22, %c0_23, %c0_24] : memref<1x1x8x8xbf16, #tpu.memory_space<vmem>>, vector<1x1x8x8xbf16>
    %49 = vector.shape_cast %48 : vector<1x1x8x8xbf16> to vector<8x8xbf16>
    %50 = vector.shape_cast %47 : vector<8x8xbf16> to vector<1x1x8x8xbf16>
    tpu.vector_store %arg8[%c0_21, %c0_22, %c0_23, %c0_24], %50 {strides = array<i32>} : memref<1x1x8x8xbf16, #tpu.memory_space<vmem>>, vector<1x1x8x8xbf16>,
    return
  }
  func.func @transform_0(%arg0: i32, %arg1: i32, %arg2: memref<1xi32, #tpu.memory_space<smem>>) -> (i32, i32, i32, i32) {
    %c0_i32 = arith.constant 0 : i32
    %c0_i32_0 = arith.constant 0 : i32
    %c0_i32_1 = arith.constant 0 : i32
    return %arg0, %arg1, %c0_i32, %c0_i32_0 : i32, i32, i32, i32
  }
  func.func @transform_1(%arg0: i32, %arg1: i32, %arg2: memref<1xi32, #tpu.memory_space<smem>>) -> (i32, i32, i32, i32) {
    %c0_i32 = arith.constant 0 : i32
    %c0_i32_0 = arith.constant 0 : i32
    %c0_i32_1 = arith.constant 0 : i32
    return %arg0, %arg1, %c0_i32, %c0_i32_0 : i32, i32, i32, i32
  }
  func.func @transform_2(%arg0: i32, %arg1: i32, %arg2: memref<1xi32, #tpu.memory_space<smem>>) -> (i32, i32, i32, i32) {
    %c0_i32 = arith.constant 0 : i32
    %c0_i32_0 = arith.constant 0 : i32
    %c0_i32_1 = arith.constant 0 : i32
    return %arg0, %arg1, %c0_i32, %c0_i32_0 : i32, i32, i32, i32
  }
  func.func @transform_3(%arg0: i32, %arg1: i32, %arg2: memref<1xi32, #tpu.memory_space<smem>>) -> (i32, i32) {
    %c0_i32 = arith.constant 0 : i32
    %c0_i32_0 = arith.constant 0 : i32
    %c0_i32_1 = arith.constant 0 : i32
    return %c0_i32, %c0_i32_0 : i32, i32
  }
  func.func @transform_4(%arg0: i32, %arg1: i32, %arg2: memref<1xi32, #tpu.memory_space<smem>>) -> (i32, i32) {
    %c0_i32 = arith.constant 0 : i32
    %c0_i32_0 = arith.constant 0 : i32
    %c0_i32_1 = arith.constant 0 : i32
    return %c0_i32, %c0_i32_0 : i32, i32
  }
  func.func @transform_5(%arg0: i32, %arg1: i32, %arg2: memref<1xi32, #tpu.memory_space<smem>>) -> (i32, i32, i32, i32) {
    %c0_i32 = arith.constant 0 : i32
    %c0_i32_0 = arith.constant 0 : i32
    %c0_i32_1 = arith.constant 0 : i32
    return %arg0, %arg1, %c0_i32, %c0_i32_0 : i32, i32, i32, i32
  }
}

module attributes {stable_mosaic.version = 11 : i64} {
  func.func @_matmul_res_kernel(%arg0: i32, %arg1: i32, %arg2: i32, %arg3: memref<16x32xbf16, #tpu.memory_space<vmem>>, %arg4: memref<32x32xbf16, #tpu.memory_space<vmem>>, %arg5: memref<16x32xf32, #tpu.memory_space<vmem>>, %arg6: memref<16x32xf32, #tpu.memory_space<vmem>>, %arg7: memref<16x32xf32, #tpu.memory_space<vmem>>) attributes {dimension_semantics = [#tpu.dimension_semantics<parallel>, #tpu.dimension_semantics<parallel>, #tpu.dimension_semantics<arbitrary>], iteration_bounds = array<i64: 1, 1, 1>, scalar_prefetch = 0 : i64, scratch_operands = 1 : i64, tpu.core_type = #tpu.core_type<tc>, window_params = [{transform_indices = @transform_0, window_bounds = array<i64: 16, 32>}, {transform_indices = @transform_1, window_bounds = array<i64: 32, 32>}, {transform_indices = @transform_2, window_bounds = array<i64: 16, 32>}, {transform_indices = @transform_3, window_bounds = array<i64: 16, 32>}]} {
    %c0_i32 = arith.constant 0 : i32
    %0 = arith.cmpi eq, %arg2, %c0_i32 : i32
    %1 = arith.extui %0 : i1 to i32
    %c0_i32_0 = arith.constant 0 : i32
    %2 = arith.cmpi ne, %1, %c0_i32_0 : i32
    scf.if %2 {
      %c0_10 = arith.constant 0 : index
      %c0_11 = arith.constant 0 : index
      %12 = vector.load %arg5[%c0_10, %c0_11] : memref<16x32xf32, #tpu.memory_space<vmem>>, vector<16x32xf32>
      %c0_12 = arith.constant 0 : index
      %c0_13 = arith.constant 0 : index
      %13 = vector.load %arg7[%c0_12, %c0_13] : memref<16x32xf32, #tpu.memory_space<vmem>>, vector<16x32xf32>
      tpu.vector_store %arg7[%c0_12, %c0_13], %12 {strides = array<i32>} : memref<16x32xf32, #tpu.memory_space<vmem>>, vector<16x32xf32>,
    } else {
    }
    %c0 = arith.constant 0 : index
    %c0_1 = arith.constant 0 : index
    %3 = vector.load %arg7[%c0, %c0_1] : memref<16x32xf32, #tpu.memory_space<vmem>>, vector<16x32xf32>
    %c0_2 = arith.constant 0 : index
    %c0_3 = arith.constant 0 : index
    %4 = vector.load %arg3[%c0_2, %c0_3] : memref<16x32xbf16, #tpu.memory_space<vmem>>, vector<16x32xbf16>
    %c0_4 = arith.constant 0 : index
    %c0_5 = arith.constant 0 : index
    %5 = vector.load %arg4[%c0_4, %c0_5] : memref<32x32xbf16, #tpu.memory_space<vmem>>, vector<32x32xbf16>
    %cst = arith.constant dense<0.000000e+00> : vector<16x32xf32>
    %6 = tpu.matmul %4, %5, %cst {dimension_numbers = #tpu.dot_dimension_numbers<[1], [0], [0], [1], [0, 0, 1, 1], [], []>} : vector<16x32xbf16>, vector<32x32xbf16>, vector<16x32xf32> -> vector<16x32xf32>
    %7 = arith.addf %3, %6 : vector<16x32xf32>
    %c0_6 = arith.constant 0 : index
    %c0_7 = arith.constant 0 : index
    %8 = vector.load %arg7[%c0_6, %c0_7] : memref<16x32xf32, #tpu.memory_space<vmem>>, vector<16x32xf32>
    tpu.vector_store %arg7[%c0_6, %c0_7], %7 {strides = array<i32>} : memref<16x32xf32, #tpu.memory_space<vmem>>, vector<16x32xf32>,
    %c0_i32_8 = arith.constant 0 : i32
    %9 = arith.cmpi eq, %arg2, %c0_i32_8 : i32
    %10 = arith.extui %9 : i1 to i32
    %c0_i32_9 = arith.constant 0 : i32
    %11 = arith.cmpi ne, %10, %c0_i32_9 : i32
    scf.if %11 {
      %c0_10 = arith.constant 0 : index
      %c0_11 = arith.constant 0 : index
      %12 = vector.load %arg7[%c0_10, %c0_11] : memref<16x32xf32, #tpu.memory_space<vmem>>, vector<16x32xf32>
      %c0_12 = arith.constant 0 : index
      %c0_13 = arith.constant 0 : index
      %13 = vector.load %arg6[%c0_12, %c0_13] : memref<16x32xf32, #tpu.memory_space<vmem>>, vector<16x32xf32>
      tpu.vector_store %arg6[%c0_12, %c0_13], %12 {strides = array<i32>} : memref<16x32xf32, #tpu.memory_space<vmem>>, vector<16x32xf32>,
    } else {
    }
    return
  }
  func.func @transform_0(%arg0: i32, %arg1: i32, %arg2: i32) -> (i32, i32) {
    %c0_i32 = arith.constant 0 : i32
    return %arg0, %arg2 : i32, i32
  }
  func.func @transform_1(%arg0: i32, %arg1: i32, %arg2: i32) -> (i32, i32) {
    %c0_i32 = arith.constant 0 : i32
    return %arg2, %arg1 : i32, i32
  }
  func.func @transform_2(%arg0: i32, %arg1: i32, %arg2: i32) -> (i32, i32) {
    %c0_i32 = arith.constant 0 : i32
    return %arg0, %arg1 : i32, i32
  }
  func.func @transform_3(%arg0: i32, %arg1: i32, %arg2: i32) -> (i32, i32) {
    %c0_i32 = arith.constant 0 : i32
    return %arg0, %arg1 : i32, i32
  }
}

module attributes {stable_mosaic.version = 11 : i64} {
  func.func @_swiglu_kernel(%arg0: i32, %arg1: memref<16x192xf32, #tpu.memory_space<vmem>>, %arg2: memref<16x96xbf16, #tpu.memory_space<vmem>>) attributes {dimension_semantics = [#tpu.dimension_semantics<parallel>], iteration_bounds = array<i64: 1>, scalar_prefetch = 0 : i64, scratch_operands = 0 : i64, tpu.core_type = #tpu.core_type<tc>, window_params = [{transform_indices = @transform_0, window_bounds = array<i64: 16, 192>}, {transform_indices = @transform_1, window_bounds = array<i64: 16, 96>}]} {
    %c0 = arith.constant 0 : index
    %c0_0 = arith.constant 0 : index
    %0 = vector.load %arg1[%c0, %c0_0] : memref<16x192xf32, #tpu.memory_space<vmem>>, vector<16x192xf32>
    %1 = vector.extract_strided_slice %0 {offsets = [0, 0], sizes = [16, 96], strides = [1, 1]} : vector<16x192xf32> to vector<16x96xf32>
    %2 = vector.extract_strided_slice %0 {offsets = [0, 96], sizes = [16, 96], strides = [1, 1]} : vector<16x192xf32> to vector<16x96xf32>
    %3 = arith.negf %1 : vector<16x96xf32>
    %4 = math.exp %3 : vector<16x96xf32>
    %cst = arith.constant 1.000000e+00 : f32
    %5 = vector.broadcast %cst : f32 to vector<16x96xf32>
    %6 = arith.addf %5, %4 : vector<16x96xf32>
    %7 = arith.divf %5, %6 : vector<16x96xf32>
    %8 = arith.mulf %1, %7 : vector<16x96xf32>
    %9 = arith.mulf %8, %2 : vector<16x96xf32>
    %10 = arith.truncf %9 : vector<16x96xf32> to vector<16x96xbf16>
    %c0_1 = arith.constant 0 : index
    %c0_2 = arith.constant 0 : index
    %11 = vector.load %arg2[%c0_1, %c0_2] : memref<16x96xbf16, #tpu.memory_space<vmem>>, vector<16x96xbf16>
    tpu.vector_store %arg2[%c0_1, %c0_2], %10 {strides = array<i32>} : memref<16x96xbf16, #tpu.memory_space<vmem>>, vector<16x96xbf16>,
    return
  }
  func.func @transform_0(%arg0: i32) -> (i32, i32) {
    %c0_i32 = arith.constant 0 : i32
    %c0_i32_0 = arith.constant 0 : i32
    return %arg0, %c0_i32 : i32, i32
  }
  func.func @transform_1(%arg0: i32) -> (i32, i32) {
    %c0_i32 = arith.constant 0 : i32
    %c0_i32_0 = arith.constant 0 : i32
    return %arg0, %c0_i32 : i32, i32
  }
}

module attributes {stable_mosaic.version = 11 : i64} {
  func.func @_matmul_kernel(%arg0: i32, %arg1: i32, %arg2: i32, %arg3: memref<16x32xbf16, #tpu.memory_space<vmem>>, %arg4: memref<32x192xbf16, #tpu.memory_space<vmem>>, %arg5: memref<16x192xf32, #tpu.memory_space<vmem>>, %arg6: memref<16x192xf32, #tpu.memory_space<vmem>>) attributes {dimension_semantics = [#tpu.dimension_semantics<parallel>, #tpu.dimension_semantics<parallel>, #tpu.dimension_semantics<arbitrary>], iteration_bounds = array<i64: 1, 1, 1>, scalar_prefetch = 0 : i64, scratch_operands = 1 : i64, tpu.core_type = #tpu.core_type<tc>, window_params = [{transform_indices = @transform_0, window_bounds = array<i64: 16, 32>}, {transform_indices = @transform_1, window_bounds = array<i64: 32, 192>}, {transform_indices = @transform_2, window_bounds = array<i64: 16, 192>}]} {
    %c0_i32 = arith.constant 0 : i32
    %0 = arith.cmpi eq, %arg2, %c0_i32 : i32
    %1 = arith.extui %0 : i1 to i32
    %c0_i32_0 = arith.constant 0 : i32
    %2 = arith.cmpi ne, %1, %c0_i32_0 : i32
    scf.if %2 {
      %cst_10 = arith.constant 0.000000e+00 : f32
      %12 = vector.broadcast %cst_10 : f32 to vector<16x192xf32>
      %c0_11 = arith.constant 0 : index
      %c0_12 = arith.constant 0 : index
      %13 = vector.load %arg6[%c0_11, %c0_12] : memref<16x192xf32, #tpu.memory_space<vmem>>, vector<16x192xf32>
      tpu.vector_store %arg6[%c0_11, %c0_12], %12 {strides = array<i32>} : memref<16x192xf32, #tpu.memory_space<vmem>>, vector<16x192xf32>,
    } else {
    }
    %c0 = arith.constant 0 : index
    %c0_1 = arith.constant 0 : index
    %3 = vector.load %arg6[%c0, %c0_1] : memref<16x192xf32, #tpu.memory_space<vmem>>, vector<16x192xf32>
    %c0_2 = arith.constant 0 : index
    %c0_3 = arith.constant 0 : index
    %4 = vector.load %arg3[%c0_2, %c0_3] : memref<16x32xbf16, #tpu.memory_space<vmem>>, vector<16x32xbf16>
    %c0_4 = arith.constant 0 : index
    %c0_5 = arith.constant 0 : index
    %5 = vector.load %arg4[%c0_4, %c0_5] : memref<32x192xbf16, #tpu.memory_space<vmem>>, vector<32x192xbf16>
    %cst = arith.constant dense<0.000000e+00> : vector<16x192xf32>
    %6 = tpu.matmul %4, %5, %cst {dimension_numbers = #tpu.dot_dimension_numbers<[1], [0], [0], [1], [0, 0, 1, 1], [], []>} : vector<16x32xbf16>, vector<32x192xbf16>, vector<16x192xf32> -> vector<16x192xf32>
    %7 = arith.addf %3, %6 : vector<16x192xf32>
    %c0_6 = arith.constant 0 : index
    %c0_7 = arith.constant 0 : index
    %8 = vector.load %arg6[%c0_6, %c0_7] : memref<16x192xf32, #tpu.memory_space<vmem>>, vector<16x192xf32>
    tpu.vector_store %arg6[%c0_6, %c0_7], %7 {strides = array<i32>} : memref<16x192xf32, #tpu.memory_space<vmem>>, vector<16x192xf32>,
    %c0_i32_8 = arith.constant 0 : i32
    %9 = arith.cmpi eq, %arg2, %c0_i32_8 : i32
    %10 = arith.extui %9 : i1 to i32
    %c0_i32_9 = arith.constant 0 : i32
    %11 = arith.cmpi ne, %10, %c0_i32_9 : i32
    scf.if %11 {
      %c0_10 = arith.constant 0 : index
      %c0_11 = arith.constant 0 : index
      %12 = vector.load %arg6[%c0_10, %c0_11] : memref<16x192xf32, #tpu.memory_space<vmem>>, vector<16x192xf32>
      %c0_12 = arith.constant 0 : index
      %c0_13 = arith.constant 0 : index
      %13 = vector.load %arg5[%c0_12, %c0_13] : memref<16x192xf32, #tpu.memory_space<vmem>>, vector<16x192xf32>
      tpu.vector_store %arg5[%c0_12, %c0_13], %12 {strides = array<i32>} : memref<16x192xf32, #tpu.memory_space<vmem>>, vector<16x192xf32>,
    } else {
    }
    return
  }
  func.func @transform_0(%arg0: i32, %arg1: i32, %arg2: i32) -> (i32, i32) {
    %c0_i32 = arith.constant 0 : i32
    return %arg0, %arg2 : i32, i32
  }
  func.func @transform_1(%arg0: i32, %arg1: i32, %arg2: i32) -> (i32, i32) {
    %c0_i32 = arith.constant 0 : i32
    return %arg2, %arg1 : i32, i32
  }
  func.func @transform_2(%arg0: i32, %arg1: i32, %arg2: i32) -> (i32, i32) {
    %c0_i32 = arith.constant 0 : i32
    return %arg0, %arg1 : i32, i32
  }
}

module attributes {stable_mosaic.version = 11 : i64} {
  func.func @_matmul_res_kernel(%arg0: i32, %arg1: i32, %arg2: i32, %arg3: memref<16x96xbf16, #tpu.memory_space<vmem>>, %arg4: memref<96x32xbf16, #tpu.memory_space<vmem>>, %arg5: memref<16x32xf32, #tpu.memory_space<vmem>>, %arg6: memref<16x32xf32, #tpu.memory_space<vmem>>, %arg7: memref<16x32xf32, #tpu.memory_space<vmem>>) attributes {dimension_semantics = [#tpu.dimension_semantics<parallel>, #tpu.dimension_semantics<parallel>, #tpu.dimension_semantics<arbitrary>], iteration_bounds = array<i64: 1, 1, 1>, scalar_prefetch = 0 : i64, scratch_operands = 1 : i64, tpu.core_type = #tpu.core_type<tc>, window_params = [{transform_indices = @transform_0, window_bounds = array<i64: 16, 96>}, {transform_indices = @transform_1, window_bounds = array<i64: 96, 32>}, {transform_indices = @transform_2, window_bounds = array<i64: 16, 32>}, {transform_indices = @transform_3, window_bounds = array<i64: 16, 32>}]} {
    %c0_i32 = arith.constant 0 : i32
    %0 = arith.cmpi eq, %arg2, %c0_i32 : i32
    %1 = arith.extui %0 : i1 to i32
    %c0_i32_0 = arith.constant 0 : i32
    %2 = arith.cmpi ne, %1, %c0_i32_0 : i32
    scf.if %2 {
      %c0_10 = arith.constant 0 : index
      %c0_11 = arith.constant 0 : index
      %12 = vector.load %arg5[%c0_10, %c0_11] : memref<16x32xf32, #tpu.memory_space<vmem>>, vector<16x32xf32>
      %c0_12 = arith.constant 0 : index
      %c0_13 = arith.constant 0 : index
      %13 = vector.load %arg7[%c0_12, %c0_13] : memref<16x32xf32, #tpu.memory_space<vmem>>, vector<16x32xf32>
      tpu.vector_store %arg7[%c0_12, %c0_13], %12 {strides = array<i32>} : memref<16x32xf32, #tpu.memory_space<vmem>>, vector<16x32xf32>,
    } else {
    }
    %c0 = arith.constant 0 : index
    %c0_1 = arith.constant 0 : index
    %3 = vector.load %arg7[%c0, %c0_1] : memref<16x32xf32, #tpu.memory_space<vmem>>, vector<16x32xf32>
    %c0_2 = arith.constant 0 : index
    %c0_3 = arith.constant 0 : index
    %4 = vector.load %arg3[%c0_2, %c0_3] : memref<16x96xbf16, #tpu.memory_space<vmem>>, vector<16x96xbf16>
    %c0_4 = arith.constant 0 : index
    %c0_5 = arith.constant 0 : index
    %5 = vector.load %arg4[%c0_4, %c0_5] : memref<96x32xbf16, #tpu.memory_space<vmem>>, vector<96x32xbf16>
    %cst = arith.constant dense<0.000000e+00> : vector<16x32xf32>
    %6 = tpu.matmul %4, %5, %cst {dimension_numbers = #tpu.dot_dimension_numbers<[1], [0], [0], [1], [0, 0, 1, 1], [], []>} : vector<16x96xbf16>, vector<96x32xbf16>, vector<16x32xf32> -> vector<16x32xf32>
    %7 = arith.addf %3, %6 : vector<16x32xf32>
    %c0_6 = arith.constant 0 : index
    %c0_7 = arith.constant 0 : index
    %8 = vector.load %arg7[%c0_6, %c0_7] : memref<16x32xf32, #tpu.memory_space<vmem>>, vector<16x32xf32>
    tpu.vector_store %arg7[%c0_6, %c0_7], %7 {strides = array<i32>} : memref<16x32xf32, #tpu.memory_space<vmem>>, vector<16x32xf32>,
    %c0_i32_8 = arith.constant 0 : i32
    %9 = arith.cmpi eq, %arg2, %c0_i32_8 : i32
    %10 = arith.extui %9 : i1 to i32
    %c0_i32_9 = arith.constant 0 : i32
    %11 = arith.cmpi ne, %10, %c0_i32_9 : i32
    scf.if %11 {
      %c0_10 = arith.constant 0 : index
      %c0_11 = arith.constant 0 : index
      %12 = vector.load %arg7[%c0_10, %c0_11] : memref<16x32xf32, #tpu.memory_space<vmem>>, vector<16x32xf32>
      %c0_12 = arith.constant 0 : index
      %c0_13 = arith.constant 0 : index
      %13 = vector.load %arg6[%c0_12, %c0_13] : memref<16x32xf32, #tpu.memory_space<vmem>>, vector<16x32xf32>
      tpu.vector_store %arg6[%c0_12, %c0_13], %12 {strides = array<i32>} : memref<16x32xf32, #tpu.memory_space<vmem>>, vector<16x32xf32>,
    } else {
    }
    return
  }
  func.func @transform_0(%arg0: i32, %arg1: i32, %arg2: i32) -> (i32, i32) {
    %c0_i32 = arith.constant 0 : i32
    return %arg0, %arg2 : i32, i32
  }
  func.func @transform_1(%arg0: i32, %arg1: i32, %arg2: i32) -> (i32, i32) {
    %c0_i32 = arith.constant 0 : i32
    return %arg2, %arg1 : i32, i32
  }
  func.func @transform_2(%arg0: i32, %arg1: i32, %arg2: i32) -> (i32, i32) {
    %c0_i32 = arith.constant 0 : i32
    return %arg0, %arg1 : i32, i32
  }
  func.func @transform_3(%arg0: i32, %arg1: i32, %arg2: i32) -> (i32, i32) {
    %c0_i32 = arith.constant 0 : i32
    return %arg0, %arg1 : i32, i32
  }
}

module attributes {stable_mosaic.version = 11 : i64} {
  func.func @_rmsnorm_kernel(%arg0: i32, %arg1: memref<2x32xf32, #tpu.memory_space<vmem>>, %arg2: memref<1x32xf32, #tpu.memory_space<vmem>>, %arg3: memref<2x32xbf16, #tpu.memory_space<vmem>>) attributes {dimension_semantics = [#tpu.dimension_semantics<parallel>], iteration_bounds = array<i64: 1>, scalar_prefetch = 0 : i64, scratch_operands = 0 : i64, tpu.core_type = #tpu.core_type<tc>, window_params = [{transform_indices = @transform_0, window_bounds = array<i64: 2, 32>}, {pipeline_mode = #tpu.pipeline_mode<synchronous>, transform_indices = @transform_1, window_bounds = array<i64: 1, 32>}, {transform_indices = @transform_2, window_bounds = array<i64: 2, 32>}]} {
    %c0 = arith.constant 0 : index
    %c0_0 = arith.constant 0 : index
    %0 = vector.load %arg1[%c0, %c0_0] : memref<2x32xf32, #tpu.memory_space<vmem>>, vector<2x32xf32>
    %1 = arith.mulf %0, %0 : vector<2x32xf32>
    %cst = arith.constant dense<0.000000e+00> : vector<2xf32>
    %2 = vector.multi_reduction <add>, %1, %cst [1] : vector<2x32xf32> to vector<2xf32>
    %3 = vector.shape_cast %2 : vector<2xf32> to vector<2x1xf32>
    %cst_1 = arith.constant 3.200000e+01 : f32
    %4 = vector.broadcast %cst_1 : f32 to vector<2x1xf32>
    %5 = arith.divf %3, %4 : vector<2x1xf32>
    %cst_2 = arith.constant 9.99999974E-6 : f32
    %6 = vector.broadcast %cst_2 : f32 to vector<2x1xf32>
    %7 = arith.addf %5, %6 : vector<2x1xf32>
    %8 = math.rsqrt %7 : vector<2x1xf32>
    %9 = vector.broadcast %8 : vector<2x1xf32> to vector<2x32xf32>
    %10 = arith.mulf %0, %9 : vector<2x32xf32>
    %c0_3 = arith.constant 0 : index
    %c0_4 = arith.constant 0 : index
    %11 = vector.load %arg2[%c0_3, %c0_4] : memref<1x32xf32, #tpu.memory_space<vmem>>, vector<1x32xf32>
    %12 = vector.broadcast %11 : vector<1x32xf32> to vector<2x32xf32>
    %13 = arith.mulf %10, %12 : vector<2x32xf32>
    %14 = arith.truncf %13 : vector<2x32xf32> to vector<2x32xbf16>
    %c0_5 = arith.constant 0 : index
    %c0_6 = arith.constant 0 : index
    %15 = vector.load %arg3[%c0_5, %c0_6] : memref<2x32xbf16, #tpu.memory_space<vmem>>, vector<2x32xbf16>
    tpu.vector_store %arg3[%c0_5, %c0_6], %14 {strides = array<i32>} : memref<2x32xbf16, #tpu.memory_space<vmem>>, vector<2x32xbf16>,
    return
  }
  func.func @transform_0(%arg0: i32) -> (i32, i32) {
    %c0_i32 = arith.constant 0 : i32
    %c0_i32_0 = arith.constant 0 : i32
    return %arg0, %c0_i32 : i32, i32
  }
  func.func @transform_1(%arg0: i32) -> (i32, i32) {
    %c0_i32 = arith.constant 0 : i32
    %c0_i32_0 = arith.constant 0 : i32
    %c0_i32_1 = arith.constant 0 : i32
    return %c0_i32, %c0_i32_0 : i32, i32
  }
  func.func @transform_2(%arg0: i32) -> (i32, i32) {
    %c0_i32 = arith.constant 0 : i32
    %c0_i32_0 = arith.constant 0 : i32
    return %arg0, %c0_i32 : i32, i32
  }
}

module attributes {stable_mosaic.version = 11 : i64} {
  func.func @_matmul_kernel(%arg0: i32, %arg1: i32, %arg2: i32, %arg3: memref<2x32xbf16, #tpu.memory_space<vmem>>, %arg4: memref<32x64xbf16, #tpu.memory_space<vmem>>, %arg5: memref<2x64xf32, #tpu.memory_space<vmem>>, %arg6: memref<2x64xf32, #tpu.memory_space<vmem>>) attributes {dimension_semantics = [#tpu.dimension_semantics<parallel>, #tpu.dimension_semantics<parallel>, #tpu.dimension_semantics<arbitrary>], iteration_bounds = array<i64: 1, 1, 1>, scalar_prefetch = 0 : i64, scratch_operands = 1 : i64, tpu.core_type = #tpu.core_type<tc>, window_params = [{transform_indices = @transform_0, window_bounds = array<i64: 2, 32>}, {transform_indices = @transform_1, window_bounds = array<i64: 32, 64>}, {transform_indices = @transform_2, window_bounds = array<i64: 2, 64>}]} {
    %c0_i32 = arith.constant 0 : i32
    %0 = arith.cmpi eq, %arg2, %c0_i32 : i32
    %1 = arith.extui %0 : i1 to i32
    %c0_i32_0 = arith.constant 0 : i32
    %2 = arith.cmpi ne, %1, %c0_i32_0 : i32
    scf.if %2 {
      %cst_10 = arith.constant 0.000000e+00 : f32
      %12 = vector.broadcast %cst_10 : f32 to vector<2x64xf32>
      %c0_11 = arith.constant 0 : index
      %c0_12 = arith.constant 0 : index
      %13 = vector.load %arg6[%c0_11, %c0_12] : memref<2x64xf32, #tpu.memory_space<vmem>>, vector<2x64xf32>
      tpu.vector_store %arg6[%c0_11, %c0_12], %12 {strides = array<i32>} : memref<2x64xf32, #tpu.memory_space<vmem>>, vector<2x64xf32>,
    } else {
    }
    %c0 = arith.constant 0 : index
    %c0_1 = arith.constant 0 : index
    %3 = vector.load %arg6[%c0, %c0_1] : memref<2x64xf32, #tpu.memory_space<vmem>>, vector<2x64xf32>
    %c0_2 = arith.constant 0 : index
    %c0_3 = arith.constant 0 : index
    %4 = vector.load %arg3[%c0_2, %c0_3] : memref<2x32xbf16, #tpu.memory_space<vmem>>, vector<2x32xbf16>
    %c0_4 = arith.constant 0 : index
    %c0_5 = arith.constant 0 : index
    %5 = vector.load %arg4[%c0_4, %c0_5] : memref<32x64xbf16, #tpu.memory_space<vmem>>, vector<32x64xbf16>
    %cst = arith.constant dense<0.000000e+00> : vector<2x64xf32>
    %6 = tpu.matmul %4, %5, %cst {dimension_numbers = #tpu.dot_dimension_numbers<[1], [0], [0], [1], [0, 0, 1, 1], [], []>} : vector<2x32xbf16>, vector<32x64xbf16>, vector<2x64xf32> -> vector<2x64xf32>
    %7 = arith.addf %3, %6 : vector<2x64xf32>
    %c0_6 = arith.constant 0 : index
    %c0_7 = arith.constant 0 : index
    %8 = vector.load %arg6[%c0_6, %c0_7] : memref<2x64xf32, #tpu.memory_space<vmem>>, vector<2x64xf32>
    tpu.vector_store %arg6[%c0_6, %c0_7], %7 {strides = array<i32>} : memref<2x64xf32, #tpu.memory_space<vmem>>, vector<2x64xf32>,
    %c0_i32_8 = arith.constant 0 : i32
    %9 = arith.cmpi eq, %arg2, %c0_i32_8 : i32
    %10 = arith.extui %9 : i1 to i32
    %c0_i32_9 = arith.constant 0 : i32
    %11 = arith.cmpi ne, %10, %c0_i32_9 : i32
    scf.if %11 {
      %c0_10 = arith.constant 0 : index
      %c0_11 = arith.constant 0 : index
      %12 = vector.load %arg6[%c0_10, %c0_11] : memref<2x64xf32, #tpu.memory_space<vmem>>, vector<2x64xf32>
      %c0_12 = arith.constant 0 : index
      %c0_13 = arith.constant 0 : index
      %13 = vector.load %arg5[%c0_12, %c0_13] : memref<2x64xf32, #tpu.memory_space<vmem>>, vector<2x64xf32>
      tpu.vector_store %arg5[%c0_12, %c0_13], %12 {strides = array<i32>} : memref<2x64xf32, #tpu.memory_space<vmem>>, vector<2x64xf32>,
    } else {
    }
    return
  }
  func.func @transform_0(%arg0: i32, %arg1: i32, %arg2: i32) -> (i32, i32) {
    %c0_i32 = arith.constant 0 : i32
    return %arg0, %arg2 : i32, i32
  }
  func.func @transform_1(%arg0: i32, %arg1: i32, %arg2: i32) -> (i32, i32) {
    %c0_i32 = arith.constant 0 : i32
    return %arg2, %arg1 : i32, i32
  }
  func.func @transform_2(%arg0: i32, %arg1: i32, %arg2: i32) -> (i32, i32) {
    %c0_i32 = arith.constant 0 : i32
    return %arg0, %arg1 : i32, i32
  }
}

</mosaic_0001>

<llo_original>
// kernel: transformer_forward.18
$region0: #{transformer_forward.18}
  #allocation0 [shape = 'u32[]', space=smem, size = 0x4, offset = 0x4, fixed_abs, tag = 'smem constant byte address 0x4 - core index']
  #allocation1 [shape = 'u32[144,128]{1,0:T(1,128)}', space=vmem, size = 0x12000, scoped, tag = 'internal scratch']
  %s0 = inlined_call_operand.vmem [shape: f32[16,32], index: 0, kind: input, shape index: {}]
  %s1 = inlined_call_operand.vmem [shape: f32[1,32], index: 1, kind: input, shape index: {}]
  %s2 = inlined_call_operand.vmem [shape: bf16[16,32], index: 2, kind: output, shape index: {}]
  %s3 = sld [smem:[#allocation0]]
  $region18: #{transformer_forward.18} parent=0
    _
  %s5 = ssub.s32 1, %s3
  %s6 = scalar_select 0, %s5, %s3
  // Predicated region
  $region2: #{transformer_forward.18} parent=0 // pred_check
    _
  $region3: #{transformer_forward.18} parent=0 // pred_check_branch
    %8 = sbr.rel (0) target = $region5
  $region4: #{transformer_forward.18} parent=0 // pred_region
    _
  $region5: #{transformer_forward.18} parent=0 // pred_fallthru
    _
  // Predicated region
  $region6: #{transformer_forward.18} parent=0 // pred_check
    _
  $region7: #{transformer_forward.18} parent=0 // pred_check_branch
    %10 = sbr.rel (0) target = $region9
  $region8: #{transformer_forward.18} parent=0 // pred_region
    _
  $region9: #{transformer_forward.18} parent=0 // pred_fallthru
    _
  %v11 = vld [vmem:[%s0] sm:$0xff]
  %v12 = vld [vmem:[%s0 + $0x8] sm:$0xff]
  %v13 = vmul.f32 %v11, %v11
  %v14 = vmul.f32 %v12, %v12
  %vm15 = vcmask 261120
  %v16 = vsel %vm15, %v13, 0.0
  %17 = vadd.xlane.f32.xlu0 %v16
  %v18 = vpop.xlane.xlu0 %17
  %v19 = vsel %vm15, %v14, 0.0
  %20 = vadd.xlane.f32.xlu0 %v19
  %v21 = vpop.xlane.xlu0 %20
  %v22 = vrcp.pop 32.0
  %v23 = vmul.f32 %v18, %v22
  %v24 = vmul.f32 %v21, %v22
  %v25 = vadd.f32 %v23, 1e-05
  %v26 = vadd.f32 %v24, 1e-05
  %v27 = vrsqrt.pop %v25
  %v28 = vrsqrt.pop %v26
  %v29 = vmul.f32 %v11, %v27
  %v30 = vmul.f32 %v12, %v28
  %v31 = vld [vmem:[%s1] sm:$0x1]
  %v33 = vlaneseq
  %v34 = vshrl.u32 %v33, 7
  %v35 = vsub.s32 0, %v34
  %v36 = vrot.slane %v31, %v35
  %v38 = vmul.f32 %v29, %v36
  %v39 = vmul.f32 %v30, %v36
  %v40 = vpack.c.bf16 %v39, %v38
  %v42 = vunpack.c.l.b16 %v40
  %v43 = vunpack.c.h.b16 %v40
  %v44 = vpack.c.b16 %v42, %v42
  %v45 = vpack.c.b16 %v43, %v43
  %vm48 = vcmask 257024
  %49 = vst.msk [vmem:[%s2] sm:$0xf] %vm48, %v44
  %50 = vst.msk [vmem:[%s2 + $0x4] sm:$0xf] %vm48, %v45
  // Predicated region
  $region10: #{transformer_forward.18} parent=0 // pred_check
    _
  $region11: #{transformer_forward.18} parent=0 // pred_check_branch
    %52 = sbr.rel (0) target = $region13
  $region12: #{transformer_forward.18} parent=0 // pred_region
    _
  $region13: #{transformer_forward.18} parent=0 // pred_fallthru
    _
  // Predicated region
  $region14: #{transformer_forward.18} parent=0 // pred_check
    _
  $region15: #{transformer_forward.18} parent=0 // pred_check_branch
    %54 = sbr.rel (0) target = $region17
  $region16: #{transformer_forward.18} parent=0 // pred_region
    _
  $region17: #{transformer_forward.18} parent=0 // pred_fallthru
    _

// kernel: transformer_forward.19
$region0: #{transformer_forward.19}
  #allocation0 [shape = 'u32[]', space=smem, size = 0x4, offset = 0x4, fixed_abs, tag = 'smem constant byte address 0x4 - core index']
  #allocation1 [shape = 'u32[144,128]{1,0:T(1,128)}', space=vmem, size = 0x12000, scoped, tag = 'internal scratch']
  #allocation2 [shape = 'f32[16,96]{1,0:T(8,128)}', space=vmem, size = 0x2000, scoped, tag = 'scratch operand']
  %s0 = inlined_call_operand.vmem [shape: bf16[16,32], index: 0, kind: input, shape index: {}]
  %s1 = inlined_call_operand.vmem [shape: bf16[32,96], index: 1, kind: input, shape index: {}]
  %s2 = inlined_call_operand.vmem [shape: bf16[16,96], index: 2, kind: output, shape index: {}]
  %s3 = sld [smem:[#allocation0]]
  $region26: #{transformer_forward.19} parent=0
    _
  %s5 = ssub.s32 1, %s3
  %s6 = scalar_select 0, %s5, %s3
  // Predicated region
  $region2: #{transformer_forward.19} parent=0 // pred_check
    _
  $region3: #{transformer_forward.19} parent=0 // pred_check_branch
    %8 = sbr.rel (0) target = $region5
  $region4: #{transformer_forward.19} parent=0 // pred_region
    _
  $region5: #{transformer_forward.19} parent=0 // pred_fallthru
    _
  // Predicated region
  $region6: #{transformer_forward.19} parent=0 // pred_check
    _
  $region7: #{transformer_forward.19} parent=0 // pred_check_branch
    %10 = sbr.rel (0) target = $region9
  $region8: #{transformer_forward.19} parent=0 // pred_region
    _
  $region9: #{transformer_forward.19} parent=0 // pred_fallthru
    _
  %p12 = scmp.eq.s32.totalorder 0, 0
  // Predicated region
  $region10: #{transformer_forward.19} parent=0 // pred_check
    %p13 = pneg %p12
  $region11: #{transformer_forward.19} parent=0 // pred_check_branch
    %15 = sbr.rel (%p13) target = $region13
  $region12: #{transformer_forward.19} parent=0 // pred_region
    %vm16 = vcmask 785408
    %17 = vst.msk [vmem:[#allocation2] sm:$0xff] %vm16, 0.0
    %18 = vst.msk [vmem:[#allocation2 + $0x8] sm:$0xff] %vm16, 0.0
  $region13: #{transformer_forward.19} parent=0 // pred_fallthru
    _
  %v19 = vld [vmem:[#allocation2] sm:$0xff]
  %v20 = vld [vmem:[#allocation2 + $0x8] sm:$0xff]
  %v21 = vld [vmem:[%s0] sm:$0xf]
  %v22 = vld [vmem:[%s0 + $0x4] sm:$0xf]
  %v23 = vld [vmem:[%s1] sm:$0xf]
  %v24 = vld [vmem:[%s1 + $0x4] sm:$0xf]
  %v25 = vld [vmem:[%s1 + $0x8] sm:$0xf]
  %v26 = vld [vmem:[%s1 + $0xc] sm:$0xf]
  %v29 = vunpack.c.l.b16 %v21
  %v30 = vunpack.c.l.b16 %v22
  %v31 = vpack.c.b16 %v30, %v29
  %v36 = vunpack.c.l.b16 %v23
  %v37 = vunpack.c.l.b16 %v24
  %v38 = vunpack.c.l.b16 %v25
  %v39 = vunpack.c.l.b16 %v26
  %v40 = vpack.c.b16 %v37, %v36
  %v41 = vpack.c.b16 %v39, %v38
  %vm44 = vcmask 261120
  %v46 = vsel %vm44, %v31, 0
  %48 = vmatprep.subr.bf16.mxu0 0
  %49 = vmatpush1.bf16.msra.mxu0 0
  %50 = vmatprep.subr.bf16.mxu0 0
  %51 = vmatpush1.bf16.msra.mxu0 0
  %52 = vmatprep.subr.bf16.mxu0 0
  %53 = vmatpush1.bf16.msra.mxu0 0
  %54 = vmatprep.subr.bf16.mxu0 0
  %55 = vmatpush1.bf16.msra.mxu0 0
  %56 = vmatprep.subr.bf16.mxu0 0
  %57 = vmatpush1.bf16.msra.mxu0 0
  %58 = vmatprep.subr.bf16.mxu0 0
  %59 = vmatpush1.bf16.msra.mxu0 0
  %60 = vmatprep.subr.bf16.mxu0 0
  %61 = vmatpush1.bf16.msra.mxu0 %v41
  %62 = vmatprep.subr.bf16.mxu0 0
  %63 = vmatpush1.bf16.msra.mxu0 %v40
  %64 = vmatprep.subr.bf16.mxu0 0
  %65 = vmatpush2.bf16.msra.mxu0 0
  %66 = vmatprep.subr.bf16.mxu0 0
  %67 = vmatpush2.bf16.msra.mxu0 0
  %68 = vmatprep.subr.bf16.mxu0 0
  %69 = vmatpush2.bf16.msra.mxu0 0
  %70 = vmatprep.subr.bf16.mxu0 0
  %71 = vmatpush2.bf16.msra.mxu0 0
  %72 = vmatprep.subr.bf16.mxu0 0
  %73 = vmatpush2.bf16.msra.mxu0 0
  %74 = vmatprep.subr.bf16.mxu0 0
  %75 = vmatpush2.bf16.msra.mxu0 0
  %76 = vmatprep.subr.bf16.mxu0 0
  %77 = vmatpush2.bf16.msra.mxu0 0
  %78 = vmatprep.subr.bf16.mxu0 0
  %79 = vmatpush2.bf16.msra.mxu0 0
  %80 = vmatprep.mubr.bf16.mxu0 0
  %81 = vmatmul.mubr.bf16.gmra.mxu0 %v46
  %v82 = vpop.f32.mrf.mxu0
  %v83 = vadd.f32 0.0, %v82
  %v84 = vpop.f32.mrf.mxu0
  %v85 = vpop.f32.mrf.mxu0
  %v86 = vadd.f32 0.0, %v85
  %v87 = vpop.f32.mrf.mxu0
  %88 = vdwg.mxu0
  %v89 = vadd.f32 %v19, %v83
  %v90 = vadd.f32 %v20, %v86
  %vm91 = vcmask 785408
  %92 = vst.msk [vmem:[#allocation2] sm:$0xff] %vm91, %v89
  %93 = vst.msk [vmem:[#allocation2 + $0x8] sm:$0xff] %vm91, %v90
  // Predicated region
  $region14: #{transformer_forward.19} parent=0 // pred_check
    %p94 = pneg %p12
  $region15: #{transformer_forward.19} parent=0 // pred_check_branch
    %96 = sbr.rel (%p94) target = $region17
  $region16: #{transformer_forward.19} parent=0 // pred_region
    %v97 = vld [vmem:[#allocation2] sm:$0xff]
    %v98 = vld [vmem:[#allocation2 + $0x8] sm:$0xff]
    %v99 = vpack.c.bf16 %v98, %v97
    %v101 = vunpack.c.l.b16 %v99
    %v102 = vunpack.c.h.b16 %v99
    %v103 = vpack.c.b16 %v101, %v101
    %v104 = vpack.c.b16 %v102, %v102
    %vm107 = vcmask 781312
    %108 = vst.msk [vmem:[%s2] sm:$0xf] %vm107, %v103
    %109 = vst.msk [vmem:[%s2 + $0x4] sm:$0xf] %vm107, %v104
  $region17: #{transformer_forward.19} parent=0 // pred_fallthru
    _
  // Predicated region
  $region18: #{transformer_forward.19} parent=0 // pred_check
    _
  $region19: #{transformer_forward.19} parent=0 // pred_check_branch
    %111 = sbr.rel (0) target = $region21
  $region20: #{transformer_forward.19} parent=0 // pred_region
    _
  $region21: #{transformer_forward.19} parent=0 // pred_fallthru
    _
  // Predicated region
  $region22: #{transformer_forward.19} parent=0 // pred_check
    _
  $region23: #{transformer_forward.19} parent=0 // pred_check_branch
    %113 = sbr.rel (0) target = $region25
  $region24: #{transformer_forward.19} parent=0 // pred_region
    _
  $region25: #{transformer_forward.19} parent=0 // pred_fallthru
    _

// kernel: transformer_forward.20
$region0: #{transformer_forward.20}
  #allocation0 [shape = 'u32[]', space=smem, size = 0x4, offset = 0x4, fixed_abs, tag = 'smem constant byte address 0x4 - core index']
  #allocation1 [shape = 'u32[144,128]{1,0:T(1,128)}', space=vmem, size = 0x12000, scoped, tag = 'internal scratch']
  #allocation2 [shape = 's32[1]{0}', space=sflag, size = 0x4, scoped, tag = 'scoped memory for transformer_forward.20']
  #allocation3 [shape = 's32[1]{0:T(128)S(6)}', space=smem, size = 0x200, scoped, tag = 'prefetched SMEM operand 0']
  %s0 = inlined_call_operand.<no memory space> [shape: s32[1], index: 0, kind: input, shape index: {}]
  %s1 = inlined_call_operand.vmem [shape: bf16[2,4,8,8], index: 1, kind: input, shape index: {}]
  %s2 = inlined_call_operand.vmem [shape: bf16[2,4,8,8], index: 2, kind: input, shape index: {}]
  %s3 = inlined_call_operand.vmem [shape: bf16[2,4,8,8], index: 3, kind: input, shape index: {}]
  %s4 = inlined_call_operand.vmem [shape: f32[8,8], index: 4, kind: input, shape index: {}]
  %s5 = inlined_call_operand.vmem [shape: f32[8,8], index: 5, kind: input, shape index: {}]
  %s6 = inlined_call_operand.vmem [shape: bf16[2,4,8,8], index: 6, kind: output, shape index: {}]
  %s7 = sld [smem:[#allocation0]]
  $region53: #{transformer_forward.20} parent=0
    _
  %s9 = ssub.s32 1, %s7
  %s10 = scalar_select 0, %s9, %s7
  %11 = sst [smem:[#allocation3]] %s0
  loop: start=0, step=1, limit=10
  $region2: #{transformer_forward.20} parent=0 // loop_pre_header
    _
  $region3: #{transformer_forward.20} parent=0 // loop_header
    %s13 = sphi 0, %s17
    %p14 = scmp.ge.s32.totalorder %s13, 10
    %s20 = sphi 0, %s32
    %s21 = sphi 0, %s28
    %s22 = sphi 0, %s20
    %s23 = sphi 0, %s21
    %s24 = sphi 0, %s22
    %s25 = sphi 0, %s23
    %s37 = sphi 0, %s39
    %s40 = sphi 0, %s37
    %s41 = sphi 0, %s40
    %s57 = sphi 0, %s41
    %s65 = sphi 0, %s67
    %s68 = sphi 0, %s65
    %s69 = sphi 0, %s68
    %s85 = sphi 0, %s69
    %s93 = sphi 0, %s95
    %s96 = sphi 0, %s93
    %s97 = sphi 0, %s96
    %s113 = sphi 0, %s97
    %s117 = sphi 0, %s117
    %s119 = sphi 0, %s117
    %s120 = sphi 0, %s119
    %s134 = sphi 0, %s120
    %s138 = sphi 0, %s138
    %s140 = sphi 0, %s138
    %s141 = sphi 0, %s140
    %s155 = sphi 0, %s141
    %s163 = sphi 0, %s165
    %s166 = sphi 0, %s163
    %s167 = sphi 0, %s166
    %s183 = sphi 0, %s167
  $region4: #{transformer_forward.20} parent=0 // loop_header_branch
    %16 = sbr.rel (%p14) target = $region8
  $region5: #{transformer_forward.20} parent=0 // loop_body
    %s18 = ssub.s32 %s13, 1
    %s19 = ssub.s32 %s13, 2
    %s26 = sadd.s32 1, %s21
    %p27 = scmp.ge.s32.totalorder %s26, 4
    %s28 = scalar_select %p27, 0, %s26
    %s29 = sadd.s32 1, %s20
    %s30 = scalar_select %p27, %s29, %s20
    %p31 = scmp.ge.s32.totalorder %s30, 2
    %s32 = scalar_select %p31, 0, %s30
    %s33 = ssub.s32 %s20, %s32
    %s34 = ssub.s32 %s21, %s28
    %s35 = sor.u32 %s33, %s34
    %p36 = scmp.eq.s32.totalorder %s35, 0
    %s38 = sadd.s32 %s37, 1
    %s39 = scalar_select %p36, %s37, %s38
    %p42 = pneg %p36
    %p43 = scmp.eq.s32.totalorder %s13, 7
    %p44 = por %p42, %p43
    %p45 = scmp.ne.s32.totalorder %s37, %s40
    %p46 = scmp.eq.s32.totalorder %s13, 0
    %p47 = por %p45, %p46
    %p48 = scmp.ne.s32.totalorder %s37, %s40
    %p49 = scmp.eq.s32.totalorder %s18, 7
    %p50 = por %p48, %p49
    %p51 = scmp.ne.s32.totalorder %s40, %s41
    %p52 = scmp.eq.s32.totalorder %s18, 0
    %p53 = por %p51, %p52
    %p54 = scmp.ne.s32.totalorder %s40, %s41
    %p55 = scmp.eq.s32.totalorder %s19, 7
    %p56 = por %p54, %p55
    %p58 = scmp.ne.s32.totalorder %s41, %s57
    %p59 = scmp.eq.s32.totalorder %s19, 0
    %p60 = por %p58, %p59
    %s61 = ssub.s32 %s20, %s32
    %s62 = ssub.s32 %s21, %s28
    %s63 = sor.u32 %s61, %s62
    %p64 = scmp.eq.s32.totalorder %s63, 0
    %s66 = sadd.s32 %s65, 1
    %s67 = scalar_select %p64, %s65, %s66
    %p70 = pneg %p64
    %p71 = scmp.eq.s32.totalorder %s13, 7
    %p72 = por %p70, %p71
    %p73 = scmp.ne.s32.totalorder %s65, %s68
    %p74 = scmp.eq.s32.totalorder %s13, 0
    %p75 = por %p73, %p74
    %p76 = scmp.ne.s32.totalorder %s65, %s68
    %p77 = scmp.eq.s32.totalorder %s18, 7
    %p78 = por %p76, %p77
    %p79 = scmp.ne.s32.totalorder %s68, %s69
    %p80 = scmp.eq.s32.totalorder %s18, 0
    %p81 = por %p79, %p80
    %p82 = scmp.ne.s32.totalorder %s68, %s69
    %p83 = scmp.eq.s32.totalorder %s19, 7
    %p84 = por %p82, %p83
    %p86 = scmp.ne.s32.totalorder %s69, %s85
    %p87 = scmp.eq.s32.totalorder %s19, 0
    %p88 = por %p86, %p87
    %s89 = ssub.s32 %s20, %s32
    %s90 = ssub.s32 %s21, %s28
    %s91 = sor.u32 %s89, %s90
    %p92 = scmp.eq.s32.totalorder %s91, 0
    %s94 = sadd.s32 %s93, 1
    %s95 = scalar_select %p92, %s93, %s94
    %p98 = pneg %p92
    %p99 = scmp.eq.s32.totalorder %s13, 7
    %p100 = por %p98, %p99
    %p101 = scmp.ne.s32.totalorder %s93, %s96
    %p102 = scmp.eq.s32.totalorder %s13, 0
    %p103 = por %p101, %p102
    %p104 = scmp.ne.s32.totalorder %s93, %s96
    %p105 = scmp.eq.s32.totalorder %s18, 7
    %p106 = por %p104, %p105
    %p107 = scmp.ne.s32.totalorder %s96, %s97
    %p108 = scmp.eq.s32.totalorder %s18, 0
    %p109 = por %p107, %p108
    %p110 = scmp.ne.s32.totalorder %s96, %s97
    %p111 = scmp.eq.s32.totalorder %s19, 7
    %p112 = por %p110, %p111
    %p114 = scmp.ne.s32.totalorder %s97, %s113
    %p115 = scmp.eq.s32.totalorder %s19, 0
    %p116 = por %p114, %p115
    %s118 = sadd.s32 %s117, 1
    %p121 = scmp.eq.s32.totalorder %s13, 7
    %p122 = scmp.ne.s32.totalorder %s117, %s119
    %p123 = scmp.eq.s32.totalorder %s13, 0
    %p124 = por %p122, %p123
    %p125 = scmp.ne.s32.totalorder %s117, %s119
    %p126 = scmp.eq.s32.totalorder %s18, 7
    %p127 = por %p125, %p126
    %p128 = scmp.ne.s32.totalorder %s119, %s120
    %p129 = scmp.eq.s32.totalorder %s18, 0
    %p130 = por %p128, %p129
    %p131 = scmp.ne.s32.totalorder %s119, %s120
    %p132 = scmp.eq.s32.totalorder %s19, 7
    %p133 = por %p131, %p132
    %p135 = scmp.ne.s32.totalorder %s120, %s134
    %p136 = scmp.eq.s32.totalorder %s19, 0
    %p137 = por %p135, %p136
    %s139 = sadd.s32 %s138, 1
    %p142 = scmp.eq.s32.totalorder %s13, 7
    %p143 = scmp.ne.s32.totalorder %s138, %s140
    %p144 = scmp.eq.s32.totalorder %s13, 0
    %p145 = por %p143, %p144
    %p146 = scmp.ne.s32.totalorder %s138, %s140
    %p147 = scmp.eq.s32.totalorder %s18, 7
    %p148 = por %p146, %p147
    %p149 = scmp.ne.s32.totalorder %s140, %s141
    %p150 = scmp.eq.s32.totalorder %s18, 0
    %p151 = por %p149, %p150
    %p152 = scmp.ne.s32.totalorder %s140, %s141
    %p153 = scmp.eq.s32.totalorder %s19, 7
    %p154 = por %p152, %p153
    %p156 = scmp.ne.s32.totalorder %s141, %s155
    %p157 = scmp.eq.s32.totalorder %s19, 0
    %p158 = por %p156, %p157
    %s159 = ssub.s32 %s20, %s32
    %s160 = ssub.s32 %s21, %s28
    %s161 = sor.u32 %s159, %s160
    %p162 = scmp.eq.s32.totalorder %s161, 0
    %s164 = sadd.s32 %s163, 1
    %s165 = scalar_select %p162, %s163, %s164
    %p168 = pneg %p162
    %p169 = scmp.eq.s32.totalorder %s13, 7
    %p170 = por %p168, %p169
    %p171 = scmp.ne.s32.totalorder %s163, %s166
    %p172 = scmp.eq.s32.totalorder %s13, 0
    %p173 = por %p171, %p172
    %p174 = scmp.ne.s32.totalorder %s163, %s166
    %p175 = scmp.eq.s32.totalorder %s18, 7
    %p176 = por %p174, %p175
    %p177 = scmp.ne.s32.totalorder %s166, %s167
    %p178 = scmp.eq.s32.totalorder %s18, 0
    %p179 = por %p177, %p178
    %p180 = scmp.ne.s32.totalorder %s166, %s167
    %p181 = scmp.eq.s32.totalorder %s19, 7
    %p182 = por %p180, %p181
    %p184 = scmp.ne.s32.totalorder %s167, %s183
    %p185 = scmp.eq.s32.totalorder %s19, 0
    %p186 = por %p184, %p185
    %p187 = scmp.le.s32.totalorder 1, %s13
    %p188 = scmp.lt.s32.totalorder %s13, 9
    %p189 = pnand %p187, %p188
    %p190 = pneg %p189
    // Predicated region
    $region9: #{transformer_forward.20} parent=5 // pred_check
      _
    $region10: #{transformer_forward.20} parent=5 // pred_check_branch
      %192 = sbr.rel (%p189) target = $region12
    $region11: #{transformer_forward.20} parent=5 // pred_region
      %s193 = ssub.s32 %s13, 1
      // Predicated region
      $region13: #{transformer_forward.20} parent=11 // pred_check
        %p194 = pneg %p130
      $region14: #{transformer_forward.20} parent=11 // pred_check_branch
        %196 = sbr.rel (%p194) target = $region16
      $region15: #{transformer_forward.20} parent=11 // pred_region
        _
      $region16: #{transformer_forward.20} parent=11 // pred_fallthru
        _
      // Predicated region
      $region17: #{transformer_forward.20} parent=11 // pred_check
        %p197 = pneg %p151
      $region18: #{transformer_forward.20} parent=11 // pred_check_branch
        %199 = sbr.rel (%p197) target = $region20
      $region19: #{transformer_forward.20} parent=11 // pred_region
        _
      $region20: #{transformer_forward.20} parent=11 // pred_fallthru
        _
    $region12: #{transformer_forward.20} parent=5 // pred_fallthru
      _
    %p200 = scmp.lt.s32.totalorder %s13, 8
    // Predicated region
    $region21: #{transformer_forward.20} parent=5 // pred_check
      %p201 = pneg %p200
    $region22: #{transformer_forward.20} parent=5 // pred_check_branch
      %203 = sbr.rel (%p201) target = $region24
    $region23: #{transformer_forward.20} parent=5 // pred_region
      // Predicated region
      $region25: #{transformer_forward.20} parent=23 // pred_check
        %p204 = pneg %p47
      $region26: #{transformer_forward.20} parent=23 // pred_check_branch
        %206 = sbr.rel (%p204) target = $region28
      $region27: #{transformer_forward.20} parent=23 // pred_region
        %p207 = scmp.lt.s32.totalorder %s20, 1
        %s208 = scalar_select %p207, %s20, 1
        %p209 = scmp.lt.s32.totalorder %s21, 3
        %s210 = scalar_select %p209, %s21, 3
        %s211 = smul.addr %s208, 4
        %s212 = sadd.s32 %s210, %s211
        %s213 = smul.addr %s212, 4
        %s214 = scalar_lea.vmem %s1, %s213
      $region28: #{transformer_forward.20} parent=23 // pred_fallthru
        _
      // Predicated region
      $region29: #{transformer_forward.20} parent=23 // pred_check
        %p215 = pneg %p75
      $region30: #{transformer_forward.20} parent=23 // pred_check_branch
        %217 = sbr.rel (%p215) target = $region32
      $region31: #{transformer_forward.20} parent=23 // pred_region
        %p218 = scmp.lt.s32.totalorder %s20, 1
        %s219 = scalar_select %p218, %s20, 1
        %p220 = scmp.lt.s32.totalorder %s21, 3
        %s221 = scalar_select %p220, %s21, 3
        %s222 = smul.addr %s219, 4
        %s223 = sadd.s32 %s221, %s222
        %s224 = smul.addr %s223, 4
        %s225 = scalar_lea.vmem %s2, %s224
      $region32: #{transformer_forward.20} parent=23 // pred_fallthru
        _
      // Predicated region
      $region33: #{transformer_forward.20} parent=23 // pred_check
        %p226 = pneg %p103
      $region34: #{transformer_forward.20} parent=23 // pred_check_branch
        %228 = sbr.rel (%p226) target = $region36
      $region35: #{transformer_forward.20} parent=23 // pred_region
        %p229 = scmp.lt.s32.totalorder %s20, 1
        %s230 = scalar_select %p229, %s20, 1
        %p231 = scmp.lt.s32.totalorder %s21, 3
        %s232 = scalar_select %p231, %s21, 3
        %s233 = smul.addr %s230, 4
        %s234 = sadd.s32 %s232, %s233
        %s235 = smul.addr %s234, 4
        %s236 = scalar_lea.vmem %s3, %s235
      $region36: #{transformer_forward.20} parent=23 // pred_fallthru
        _
    $region24: #{transformer_forward.20} parent=5 // pred_fallthru
      _
    %p237 = scmp.le.s32.totalorder 1, %s13
    %p238 = scmp.lt.s32.totalorder %s13, 9
    %p239 = pnand %p237, %p238
    %p240 = pneg %p239
    // Predicated region
    $region37: #{transformer_forward.20} parent=5 // pred_check
      _
    $region38: #{transformer_forward.20} parent=5 // pred_check_branch
      %242 = sbr.rel (%p239) target = $region40
    $region39: #{transformer_forward.20} parent=5 // pred_region
      %s243 = ssub.s32 %s13, 1
      %p244 = scmp.lt.s32.totalorder %s22, 1
      %s245 = scalar_select %p244, %s22, 1
      %p246 = scmp.lt.s32.totalorder %s23, 3
      %s247 = scalar_select %p246, %s23, 3
      %s248 = smul.addr %s245, 4
      %s249 = sadd.s32 %s247, %s248
      %s250 = smul.addr %s249, 4
      %s251 = scalar_lea.vmem %s1, %s250
      %p252 = pneg %p53
      %p253 = pneg %p50
      %p254 = scmp.lt.s32.totalorder %s22, 1
      %s255 = scalar_select %p254, %s22, 1
      %p256 = scmp.lt.s32.totalorder %s23, 3
      %s257 = scalar_select %p256, %s23, 3
      %s258 = smul.addr %s255, 4
      %s259 = sadd.s32 %s257, %s258
      %s260 = smul.addr %s259, 4
      %s261 = scalar_lea.vmem %s2, %s260
      %p262 = pneg %p81
      %p263 = pneg %p78
      %p264 = scmp.lt.s32.totalorder %s22, 1
      %s265 = scalar_select %p264, %s22, 1
      %p266 = scmp.lt.s32.totalorder %s23, 3
      %s267 = scalar_select %p266, %s23, 3
      %s268 = smul.addr %s265, 4
      %s269 = sadd.s32 %s267, %s268
      %s270 = smul.addr %s269, 4
      %s271 = scalar_lea.vmem %s3, %s270
      %p272 = pneg %p109
      %p273 = pneg %p106
      %p274 = pneg %p130
      %p275 = pneg %p127
      %p276 = pneg %p151
      %p277 = pneg %p148
      %p278 = pneg %p179
      %p279 = pneg %p176
      %p280 = scmp.lt.s32.totalorder %s22, 1
      %s281 = scalar_select %p280, %s22, 1
      %p282 = scmp.lt.s32.totalorder %s23, 3
      %s283 = scalar_select %p282, %s23, 3
      %s284 = smul.addr %s281, 4
      %s285 = sadd.s32 %s283, %s284
      %s286 = smul.addr %s285, 4
      %s287 = scalar_lea.vmem %s6, %s286
      %p288 = scmp.lt.s32.totalorder %s22, 1
      %s289 = scalar_select %p288, %s22, 1
      %p290 = scmp.lt.s32.totalorder %s23, 3
      %s291 = scalar_select %p290, %s23, 3
      %s292 = smul.addr %s289, 4
      %s293 = sadd.s32 %s291, %s292
      %s294 = smul.addr %s293, 4
      %s295 = scalar_lea.vmem %s1, %s294
      %p296 = scmp.lt.s32.totalorder %s22, 1
      %s297 = scalar_select %p296, %s22, 1
      %p298 = scmp.lt.s32.totalorder %s23, 3
      %s299 = scalar_select %p298, %s23, 3
      %s300 = smul.addr %s297, 4
      %s301 = sadd.s32 %s299, %s300
      %s302 = smul.addr %s301, 4
      %s303 = scalar_lea.vmem %s2, %s302
      %p304 = scmp.lt.s32.totalorder %s22, 1
      %s305 = scalar_select %p304, %s22, 1
      %p306 = scmp.lt.s32.totalorder %s23, 3
      %s307 = scalar_select %p306, %s23, 3
      %s308 = smul.addr %s305, 4
      %s309 = sadd.s32 %s307, %s308
      %s310 = smul.addr %s309, 4
      %s311 = scalar_lea.vmem %s3, %s310
      %p312 = scmp.lt.s32.totalorder %s22, 1
      %s313 = scalar_select %p312, %s22, 1
      %p314 = scmp.lt.s32.totalorder %s23, 3
      %s315 = scalar_select %p314, %s23, 3
      %s316 = smul.addr %s313, 4
      %s317 = sadd.s32 %s315, %s316
      %s318 = smul.addr %s317, 4
      %s319 = scalar_lea.vmem %s6, %s318
      %v321 = vld [vmem:[%s4] sm:$0xff]
      %v322 = vld [vmem:[%s5] sm:$0xff]
      %v323 = vld [vmem:[%s295] sm:$0xf]
      %v324 = vunpack.c.l.bf16 %v323
      %326 = vrot.lane.b32.xlu0 %v324, 124
      %v327 = vpop.permute.xlu0 %326
      %329 = vrot.lane.b32.xlu0 %v324, 4
      %v330 = vpop.permute.xlu0 %329
      %vm332 = vcmask 31744
      %v333 = vsel %vm332, %v327, %v330
      %v334 = vmul.f32 %v324, %v321
      %v335 = vmul.f32 %v333, %v322
      %v336 = vadd.f32 %v334, %v335
      %v337 = vpack.c.bf16 %v336, %v336
      %v338 = vld [vmem:[%s303] sm:$0xf]
      %v339 = vunpack.c.l.bf16 %v338
      %341 = vrot.lane.b32.xlu0 %v339, 124
      %v342 = vpop.permute.xlu0 %341
      %344 = vrot.lane.b32.xlu0 %v339, 4
      %v345 = vpop.permute.xlu0 %344
      %v347 = vsel %vm332, %v342, %v345
      %v348 = vmul.f32 %v339, %v321
      %v349 = vmul.f32 %v347, %v322
      %v350 = vadd.f32 %v348, %v349
      %v351 = vpack.c.bf16 %v350, %v350
      %vm352 = vcmask 64512
      %v354 = vsel %vm352, %v337, 0
      %v357 = vsel %vm352, %v351, 0
      %359 = vmatprep.subr.bf16.mxu0 0
      %360 = vmatpush1.bf16.xpose.msra.mxu0 0
      %361 = vmatprep.subr.bf16.mxu0 0
      %362 = vmatpush1.bf16.xpose.msra.mxu0 0
      %363 = vmatprep.subr.bf16.mxu0 0
      %364 = vmatpush1.bf16.xpose.msra.mxu0 0
      %365 = vmatprep.subr.bf16.mxu0 0
      %366 = vmatpush1.bf16.xpose.msra.mxu0 0
      %367 = vmatprep.subr.bf16.mxu0 0
      %368 = vmatpush1.bf16.xpose.msra.mxu0 0
      %369 = vmatprep.subr.bf16.mxu0 0
      %370 = vmatpush1.bf16.xpose.msra.mxu0 0
      %371 = vmatprep.subr.bf16.mxu0 0
      %372 = vmatpush1.bf16.xpose.msra.mxu0 0
      %373 = vmatprep.subr.bf16.mxu0 0
      %374 = vmatpush1.bf16.xpose.msra.mxu0 %v357
      %375 = vmatprep.subr.bf16.mxu0 0
      %376 = vmatpush2.bf16.xpose.msra.mxu0 0
      %377 = vmatprep.subr.bf16.mxu0 0
      %378 = vmatpush2.bf16.xpose.msra.mxu0 0
      %379 = vmatprep.subr.bf16.mxu0 0
      %380 = vmatpush2.bf16.xpose.msra.mxu0 0
      %381 = vmatprep.subr.bf16.mxu0 0
      %382 = vmatpush2.bf16.xpose.msra.mxu0 0
      %383 = vmatprep.subr.bf16.mxu0 0
      %384 = vmatpush2.bf16.xpose.msra.mxu0 0
      %385 = vmatprep.subr.bf16.mxu0 0
      %386 = vmatpush2.bf16.xpose.msra.mxu0 0
      %387 = vmatprep.subr.bf16.mxu0 0
      %388 = vmatpush2.bf16.xpose.msra.mxu0 0
      %389 = vmatprep.subr.bf16.mxu0 0
      %390 = vmatpush2.bf16.xpose.msra.mxu0 0
      %391 = vmatprep.mubr.bf16.mxu0 0
      %392 = vmatmul.mubr.bf16.gmra.mxu0 %v354
      %v393 = vpop.f32.mrf.mxu0
      %v394 = vadd.f32 0.0, %v393
      %v395 = vpop.f32.mrf.mxu0
      %v396 = vpop.f32.mrf.mxu0
      %v397 = vpop.f32.mrf.mxu0
      %398 = vdwg.mxu0
      %v399 = vmul.f32 %v394, 0.35355338
      %s400 = sld [smem:[#allocation3]]
      %v401 = vlaneseq
      %v402 = vshrl.u32 %v401, 7
      %v403 = vstv %s400
      %v404 = vadd.s32 %v402, %v403
      %v405 = vlaneseq
      %v406 = vand.u32 %v405, 127
      %vm407 = vcmp.le.s32.totalorder %v406, %v404
      %v408 = vsel %vm407, %v399, -1e+30
      %v409 = vsel %vm352, %v408, -inf
      %410 = vmax.xlane.f32.xlu0 %v409
      %v411 = vpop.xlane.xlu0 %410
      %v412 = vsub.f32 %v408, %v411
      %v413 = vmul.f32 %v412, 1.442695
      %v414 = vpow.pop %v413
      %v415 = vsel %vm352, %v414, 0.0
      %416 = vadd.xlane.f32.xlu0 %v415
      %v417 = vpop.xlane.xlu0 %416
      %v418 = vrcp.pop %v417
      %v419 = vmul.f32 %v414, %v418
      %v420 = vpack.c.bf16 %v419, %v419
      %v421 = vld [vmem:[%s311] sm:$0xf]
      %v423 = vsel %vm352, %v420, 0
      %vm425 = vcmask 1043456
      %v427 = vsel %vm425, %v421, 0
      %429 = vmatprep.subr.bf16.mxu0 0
      %430 = vmatpush1.bf16.msra.mxu0 0
      %431 = vmatprep.subr.bf16.mxu0 0
      %432 = vmatpush1.bf16.msra.mxu0 0
      %433 = vmatprep.subr.bf16.mxu0 0
      %434 = vmatpush1.bf16.msra.mxu0 0
      %435 = vmatprep.subr.bf16.mxu0 0
      %436 = vmatpush1.bf16.msra.mxu0 0
      %437 = vmatprep.subr.bf16.mxu0 0
      %438 = vmatpush1.bf16.msra.mxu0 0
      %439 = vmatprep.subr.bf16.mxu0 0
      %440 = vmatpush1.bf16.msra.mxu0 0
      %441 = vmatprep.subr.bf16.mxu0 0
      %442 = vmatpush1.bf16.msra.mxu0 0
      %443 = vmatprep.subr.bf16.mxu0 0
      %444 = vmatpush1.bf16.msra.mxu0 %v427
      %445 = vmatprep.subr.bf16.mxu0 0
      %446 = vmatpush2.bf16.msra.mxu0 0
      %447 = vmatprep.subr.bf16.mxu0 0
      %448 = vmatpush2.bf16.msra.mxu0 0
      %449 = vmatprep.subr.bf16.mxu0 0
      %450 = vmatpush2.bf16.msra.mxu0 0
      %451 = vmatprep.subr.bf16.mxu0 0
      %452 = vmatpush2.bf16.msra.mxu0 0
      %453 = vmatprep.subr.bf16.mxu0 0
      %454 = vmatpush2.bf16.msra.mxu0 0
      %455 = vmatprep.subr.bf16.mxu0 0
      %456 = vmatpush2.bf16.msra.mxu0 0
      %457 = vmatprep.subr.bf16.mxu0 0
      %458 = vmatpush2.bf16.msra.mxu0 0
      %459 = vmatprep.subr.bf16.mxu0 0
      %460 = vmatpush2.bf16.msra.mxu0 0
      %461 = vmatprep.mubr.bf16.mxu0 0
      %462 = vmatmul.mubr.bf16.gmra.mxu0 %v423
      %v463 = vpop.f32.mrf.mxu0
      %v464 = vadd.f32 0.0, %v463
      %v465 = vpop.f32.mrf.mxu0
      %v466 = vpop.f32.mrf.mxu0
      %v467 = vpop.f32.mrf.mxu0
      %468 = vdwg.mxu0
      %v469 = vpack.c.bf16 %v464, %v464
      %vm470 = vcmask 60416
      %471 = vst.msk [vmem:[%s319] sm:$0xf] %vm470, %v469
      %p472 = scmp.lt.s32.totalorder %s22, 1
      %s473 = scalar_select %p472, %s22, 1
      %p474 = scmp.lt.s32.totalorder %s23, 3
      %s475 = scalar_select %p474, %s23, 3
      %s476 = smul.addr %s473, 4
      %s477 = sadd.s32 %s475, %s476
      %s478 = smul.addr %s477, 4
      %s479 = scalar_lea.vmem %s6, %s478
      // Predicated region
      $region41: #{transformer_forward.20} parent=39 // pred_check
        %p480 = pneg %p176
      $region42: #{transformer_forward.20} parent=39 // pred_check_branch
        %482 = sbr.rel (%p480) target = $region44
      $region43: #{transformer_forward.20} parent=39 // pred_region
        _
      $region44: #{transformer_forward.20} parent=39 // pred_fallthru
        _
    $region40: #{transformer_forward.20} parent=5 // pred_fallthru
      _
    %p483 = scmp.le.s32.totalorder 2, %s13
    // Predicated region
    $region45: #{transformer_forward.20} parent=5 // pred_check
      %p484 = pneg %p483
    $region46: #{transformer_forward.20} parent=5 // pred_check_branch
      %486 = sbr.rel (%p484) target = $region48
    $region47: #{transformer_forward.20} parent=5 // pred_region
      %s487 = ssub.s32 %s13, 2
      // Predicated region
      $region49: #{transformer_forward.20} parent=47 // pred_check
        %p488 = pneg %p182
      $region50: #{transformer_forward.20} parent=47 // pred_check_branch
        %490 = sbr.rel (%p488) target = $region52
      $region51: #{transformer_forward.20} parent=47 // pred_region
        %p491 = scmp.lt.s32.totalorder %s24, 1
        %s492 = scalar_select %p491, %s24, 1
        %p493 = scmp.lt.s32.totalorder %s25, 3
        %s494 = scalar_select %p493, %s25, 3
        %s495 = smul.addr %s492, 4
        %s496 = sadd.s32 %s494, %s495
        %s497 = smul.addr %s496, 4
        %s498 = scalar_lea.vmem %s6, %s497
      $region52: #{transformer_forward.20} parent=47 // pred_fallthru
        _
    $region48: #{transformer_forward.20} parent=5 // pred_fallthru
      _
  $region6: #{transformer_forward.20} parent=0 // loop_footer
    %s17 = sadd.s32 1, %s13
  $region7: #{transformer_forward.20} parent=0 // loop_footer_branch
    %12 = sbr.rel target = $region3
  $region8: #{transformer_forward.20} parent=0 // loop_exit
    _

// kernel: transformer_forward.21
$region0: #{transformer_forward.21}
  #allocation0 [shape = 'u32[]', space=smem, size = 0x4, offset = 0x4, fixed_abs, tag = 'smem constant byte address 0x4 - core index']
  #allocation1 [shape = 'u32[144,128]{1,0:T(1,128)}', space=vmem, size = 0x12000, scoped, tag = 'internal scratch']
  #allocation2 [shape = 'f32[16,32]{1,0:T(8,128)}', space=vmem, size = 0x2000, scoped, tag = 'scratch operand']
  %s0 = inlined_call_operand.vmem [shape: bf16[16,32], index: 0, kind: input, shape index: {}]
  %s1 = inlined_call_operand.vmem [shape: bf16[32,32], index: 1, kind: input, shape index: {}]
  %s2 = inlined_call_operand.vmem [shape: f32[16,32], index: 2, kind: input, shape index: {}]
  %s3 = inlined_call_operand.vmem [shape: f32[16,32], index: 3, kind: output, shape index: {}]
  %s4 = sld [smem:[#allocation0]]
  $region30: #{transformer_forward.21} parent=0
    _
  %s6 = ssub.s32 1, %s4
  %s7 = scalar_select 0, %s6, %s4
  // Predicated region
  $region2: #{transformer_forward.21} parent=0 // pred_check
    _
  $region3: #{transformer_forward.21} parent=0 // pred_check_branch
    %9 = sbr.rel (0) target = $region5
  $region4: #{transformer_forward.21} parent=0 // pred_region
    _
  $region5: #{transformer_forward.21} parent=0 // pred_fallthru
    _
  // Predicated region
  $region6: #{transformer_forward.21} parent=0 // pred_check
    _
  $region7: #{transformer_forward.21} parent=0 // pred_check_branch
    %11 = sbr.rel (0) target = $region9
  $region8: #{transformer_forward.21} parent=0 // pred_region
    _
  $region9: #{transformer_forward.21} parent=0 // pred_fallthru
    _
  // Predicated region
  $region10: #{transformer_forward.21} parent=0 // pred_check
    _
  $region11: #{transformer_forward.21} parent=0 // pred_check_branch
    %13 = sbr.rel (0) target = $region13
  $region12: #{transformer_forward.21} parent=0 // pred_region
    _
  $region13: #{transformer_forward.21} parent=0 // pred_fallthru
    _
  %p15 = scmp.eq.s32.totalorder 0, 0
  // Predicated region
  $region14: #{transformer_forward.21} parent=0 // pred_check
    %p16 = pneg %p15
  $region15: #{transformer_forward.21} parent=0 // pred_check_branch
    %18 = sbr.rel (%p16) target = $region17
  $region16: #{transformer_forward.21} parent=0 // pred_region
    %v19 = vld [vmem:[%s2] sm:$0xff]
    %v20 = vld [vmem:[%s2 + $0x8] sm:$0xff]
    %vm21 = vcmask 261120
    %22 = vst.msk [vmem:[#allocation2] sm:$0xff] %vm21, %v19
    %23 = vst.msk [vmem:[#allocation2 + $0x8] sm:$0xff] %vm21, %v20
  $region17: #{transformer_forward.21} parent=0 // pred_fallthru
    _
  %v24 = vld [vmem:[#allocation2] sm:$0xff]
  %v25 = vld [vmem:[#allocation2 + $0x8] sm:$0xff]
  %v26 = vld [vmem:[%s0] sm:$0xf]
  %v27 = vld [vmem:[%s0 + $0x4] sm:$0xf]
  %v28 = vld [vmem:[%s1] sm:$0xf]
  %v29 = vld [vmem:[%s1 + $0x4] sm:$0xf]
  %v30 = vld [vmem:[%s1 + $0x8] sm:$0xf]
  %v31 = vld [vmem:[%s1 + $0xc] sm:$0xf]
  %v34 = vunpack.c.l.b16 %v26
  %v35 = vunpack.c.l.b16 %v27
  %v36 = vpack.c.b16 %v35, %v34
  %v41 = vunpack.c.l.b16 %v28
  %v42 = vunpack.c.l.b16 %v29
  %v43 = vunpack.c.l.b16 %v30
  %v44 = vunpack.c.l.b16 %v31
  %v45 = vpack.c.b16 %v42, %v41
  %v46 = vpack.c.b16 %v44, %v43
  %vm49 = vcmask 261120
  %v51 = vsel %vm49, %v36, 0
  %53 = vmatprep.subr.bf16.mxu0 0
  %54 = vmatpush1.bf16.msra.mxu0 0
  %55 = vmatprep.subr.bf16.mxu0 0
  %56 = vmatpush1.bf16.msra.mxu0 0
  %57 = vmatprep.subr.bf16.mxu0 0
  %58 = vmatpush1.bf16.msra.mxu0 0
  %59 = vmatprep.subr.bf16.mxu0 0
  %60 = vmatpush1.bf16.msra.mxu0 0
  %61 = vmatprep.subr.bf16.mxu0 0
  %62 = vmatpush1.bf16.msra.mxu0 0
  %63 = vmatprep.subr.bf16.mxu0 0
  %64 = vmatpush1.bf16.msra.mxu0 0
  %65 = vmatprep.subr.bf16.mxu0 0
  %66 = vmatpush1.bf16.msra.mxu0 %v46
  %67 = vmatprep.subr.bf16.mxu0 0
  %68 = vmatpush1.bf16.msra.mxu0 %v45
  %69 = vmatprep.subr.bf16.mxu0 0
  %70 = vmatpush2.bf16.msra.mxu0 0
  %71 = vmatprep.subr.bf16.mxu0 0
  %72 = vmatpush2.bf16.msra.mxu0 0
  %73 = vmatprep.subr.bf16.mxu0 0
  %74 = vmatpush2.bf16.msra.mxu0 0
  %75 = vmatprep.subr.bf16.mxu0 0
  %76 = vmatpush2.bf16.msra.mxu0 0
  %77 = vmatprep.subr.bf16.mxu0 0
  %78 = vmatpush2.bf16.msra.mxu0 0
  %79 = vmatprep.subr.bf16.mxu0 0
  %80 = vmatpush2.bf16.msra.mxu0 0
  %81 = vmatprep.subr.bf16.mxu0 0
  %82 = vmatpush2.bf16.msra.mxu0 0
  %83 = vmatprep.subr.bf16.mxu0 0
  %84 = vmatpush2.bf16.msra.mxu0 0
  %85 = vmatprep.mubr.bf16.mxu0 0
  %86 = vmatmul.mubr.bf16.gmra.mxu0 %v51
  %v87 = vpop.f32.mrf.mxu0
  %v88 = vadd.f32 0.0, %v87
  %v89 = vpop.f32.mrf.mxu0
  %v90 = vpop.f32.mrf.mxu0
  %v91 = vadd.f32 0.0, %v90
  %v92 = vpop.f32.mrf.mxu0
  %93 = vdwg.mxu0
  %v94 = vadd.f32 %v24, %v88
  %v95 = vadd.f32 %v25, %v91
  %96 = vst.msk [vmem:[#allocation2] sm:$0xff] %vm49, %v94
  %97 = vst.msk [vmem:[#allocation2 + $0x8] sm:$0xff] %vm49, %v95
  // Predicated region
  $region18: #{transformer_forward.21} parent=0 // pred_check
    %p98 = pneg %p15
  $region19: #{transformer_forward.21} parent=0 // pred_check_branch
    %100 = sbr.rel (%p98) target = $region21
  $region20: #{transformer_forward.21} parent=0 // pred_region
    %v101 = vld [vmem:[#allocation2] sm:$0xff]
    %v102 = vld [vmem:[#allocation2 + $0x8] sm:$0xff]
    %103 = vst.msk [vmem:[%s3] sm:$0xff] %vm49, %v101
    %104 = vst.msk [vmem:[%s3 + $0x8] sm:$0xff] %vm49, %v102
  $region21: #{transformer_forward.21} parent=0 // pred_fallthru
    _
  // Predicated region
  $region22: #{transformer_forward.21} parent=0 // pred_check
    _
  $region23: #{transformer_forward.21} parent=0 // pred_check_branch
    %106 = sbr.rel (0) target = $region25
  $region24: #{transformer_forward.21} parent=0 // pred_region
    _
  $region25: #{transformer_forward.21} parent=0 // pred_fallthru
    _
  // Predicated region
  $region26: #{transformer_forward.21} parent=0 // pred_check
    _
  $region27: #{transformer_forward.21} parent=0 // pred_check_branch
    %108 = sbr.rel (0) target = $region29
  $region28: #{transformer_forward.21} parent=0 // pred_region
    _
  $region29: #{transformer_forward.21} parent=0 // pred_fallthru
    _

// kernel: transformer_forward.24
$region0: #{transformer_forward.24}
  #allocation0 [shape = 'u32[]', space=smem, size = 0x4, offset = 0x4, fixed_abs, tag = 'smem constant byte address 0x4 - core index']
  #allocation1 [shape = 'u32[144,128]{1,0:T(1,128)}', space=vmem, size = 0x12000, scoped, tag = 'internal scratch']
  %s0 = inlined_call_operand.vmem [shape: f32[16,192], index: 0, kind: input, shape index: {}]
  %s1 = inlined_call_operand.vmem [shape: bf16[16,96], index: 1, kind: output, shape index: {}]
  %s2 = sld [smem:[#allocation0]]
  $region14: #{transformer_forward.24} parent=0
    _
  %s4 = ssub.s32 1, %s2
  %s5 = scalar_select 0, %s4, %s2
  // Predicated region
  $region2: #{transformer_forward.24} parent=0 // pred_check
    _
  $region3: #{transformer_forward.24} parent=0 // pred_check_branch
    %7 = sbr.rel (0) target = $region5
  $region4: #{transformer_forward.24} parent=0 // pred_region
    _
  $region5: #{transformer_forward.24} parent=0 // pred_fallthru
    _
  %v8 = vld [vmem:[%s0] sm:$0xff]
  %v9 = vld [vmem:[%s0 + $0x8] sm:$0xff]
  %v10 = vld [vmem:[%s0 + $0x10] sm:$0xff]
  %v11 = vld [vmem:[%s0 + $0x18] sm:$0xff]
  %v12 = vxor.u32 %v8, 2147483648
  %v13 = vxor.u32 %v10, 2147483648
  %v14 = vmul.f32 %v12, 1.442695
  %v15 = vpow.pop %v14
  %v16 = vmul.f32 %v13, 1.442695
  %v17 = vpow.pop %v16
  %v18 = vadd.f32 %v15, 1.0
  %v19 = vadd.f32 %v17, 1.0
  %v20 = vrcp.pop %v18
  %v21 = vmul.f32 1.0, %v20
  %v22 = vrcp.pop %v19
  %v23 = vmul.f32 1.0, %v22
  %v24 = vmul.f32 %v8, %v21
  %v25 = vmul.f32 %v10, %v23
  %30 = vrot.lane.b32.xlu0 %v8, 32
  %v31 = vpop.permute.xlu0 %30
  %32 = vrot.lane.b32.xlu0 %v9, 32
  %v33 = vpop.permute.xlu0 %32
  %34 = vrot.lane.b32.xlu0 %v10, 32
  %v35 = vpop.permute.xlu0 %34
  %36 = vrot.lane.b32.xlu0 %v11, 32
  %v37 = vpop.permute.xlu0 %36
  %vm38 = vcmask 261120
  %v39 = vsel %vm38, %v31, %v33
  %v40 = vsel %vm38, %v35, %v37
  %v43 = vmul.f32 %v24, %v39
  %v44 = vmul.f32 %v25, %v40
  %v45 = vpack.c.bf16 %v44, %v43
  %v47 = vunpack.c.l.b16 %v45
  %v48 = vunpack.c.h.b16 %v45
  %v49 = vpack.c.b16 %v47, %v47
  %v50 = vpack.c.b16 %v48, %v48
  %vm53 = vcmask 781312
  %54 = vst.msk [vmem:[%s1] sm:$0xf] %vm53, %v49
  %55 = vst.msk [vmem:[%s1 + $0x4] sm:$0xf] %vm53, %v50
  // Predicated region
  $region6: #{transformer_forward.24} parent=0 // pred_check
    _
  $region7: #{transformer_forward.24} parent=0 // pred_check_branch
    %57 = sbr.rel (0) target = $region9
  $region8: #{transformer_forward.24} parent=0 // pred_region
    _
  $region9: #{transformer_forward.24} parent=0 // pred_fallthru
    _
  // Predicated region
  $region10: #{transformer_forward.24} parent=0 // pred_check
    _
  $region11: #{transformer_forward.24} parent=0 // pred_check_branch
    %59 = sbr.rel (0) target = $region13
  $region12: #{transformer_forward.24} parent=0 // pred_region
    _
  $region13: #{transformer_forward.24} parent=0 // pred_fallthru
    _

// kernel: transformer_forward.23
$region0: #{transformer_forward.23}
  #allocation0 [shape = 'u32[]', space=smem, size = 0x4, offset = 0x4, fixed_abs, tag = 'smem constant byte address 0x4 - core index']
  #allocation1 [shape = 'u32[144,128]{1,0:T(1,128)}', space=vmem, size = 0x12000, scoped, tag = 'internal scratch']
  #allocation2 [shape = 'f32[16,192]{1,0:T(8,128)}', space=vmem, size = 0x4000, scoped, tag = 'scratch operand']
  %s0 = inlined_call_operand.vmem [shape: bf16[16,32], index: 0, kind: input, shape index: {}]
  %s1 = inlined_call_operand.vmem [shape: bf16[32,192], index: 1, kind: input, shape index: {}]
  %s2 = inlined_call_operand.vmem [shape: f32[16,192], index: 2, kind: output, shape index: {}]
  %s3 = sld [smem:[#allocation0]]
  $region26: #{transformer_forward.23} parent=0
    _
  %s5 = ssub.s32 1, %s3
  %s6 = scalar_select 0, %s5, %s3
  // Predicated region
  $region2: #{transformer_forward.23} parent=0 // pred_check
    _
  $region3: #{transformer_forward.23} parent=0 // pred_check_branch
    %8 = sbr.rel (0) target = $region5
  $region4: #{transformer_forward.23} parent=0 // pred_region
    _
  $region5: #{transformer_forward.23} parent=0 // pred_fallthru
    _
  // Predicated region
  $region6: #{transformer_forward.23} parent=0 // pred_check
    _
  $region7: #{transformer_forward.23} parent=0 // pred_check_branch
    %10 = sbr.rel (0) target = $region9
  $region8: #{transformer_forward.23} parent=0 // pred_region
    _
  $region9: #{transformer_forward.23} parent=0 // pred_fallthru
    _
  %p12 = scmp.eq.s32.totalorder 0, 0
  // Predicated region
  $region10: #{transformer_forward.23} parent=0 // pred_check
    %p13 = pneg %p12
  $region11: #{transformer_forward.23} parent=0 // pred_check_branch
    %15 = sbr.rel (%p13) target = $region13
  $region12: #{transformer_forward.23} parent=0 // pred_region
    %16 = vst [vmem:[#allocation2] sm:$0xff] 0.0
    %vm17 = vcmask 523264
    %18 = vst.msk [vmem:[#allocation2 + $0x8] sm:$0xff] %vm17, 0.0
    %19 = vst [vmem:[#allocation2 + $0x10] sm:$0xff] 0.0
    %20 = vst.msk [vmem:[#allocation2 + $0x18] sm:$0xff] %vm17, 0.0
  $region13: #{transformer_forward.23} parent=0 // pred_fallthru
    _
  %v21 = vld [vmem:[#allocation2] sm:$0xff]
  %v22 = vld [vmem:[#allocation2 + $0x8] sm:$0xff]
  %v23 = vld [vmem:[#allocation2 + $0x10] sm:$0xff]
  %v24 = vld [vmem:[#allocation2 + $0x18] sm:$0xff]
  %v25 = vld [vmem:[%s0] sm:$0xf]
  %v26 = vld [vmem:[%s0 + $0x4] sm:$0xf]
  %v27 = vld [vmem:[%s1] sm:$0xff]
  %v28 = vld [vmem:[%s1 + $0x8] sm:$0xff]
  %v29 = vld [vmem:[%s1 + $0x10] sm:$0xff]
  %v30 = vld [vmem:[%s1 + $0x18] sm:$0xff]
  %v33 = vunpack.c.l.b16 %v25
  %v34 = vunpack.c.l.b16 %v26
  %v35 = vpack.c.b16 %v34, %v33
  %v40 = vunpack.c.l.b16 %v27
  %v41 = vunpack.c.h.b16 %v27
  %v42 = vunpack.c.l.b16 %v28
  %v43 = vunpack.c.h.b16 %v28
  %v44 = vunpack.c.l.b16 %v29
  %v45 = vunpack.c.h.b16 %v29
  %v46 = vunpack.c.l.b16 %v30
  %v47 = vunpack.c.h.b16 %v30
  %v48 = vpack.c.b16 %v42, %v40
  %v49 = vpack.c.b16 %v43, %v41
  %v50 = vpack.c.b16 %v46, %v44
  %v51 = vpack.c.b16 %v47, %v45
  %vm56 = vcmask 261120
  %v58 = vsel %vm56, %v35, 0
  %60 = vmatprep.subr.bf16.mxu0 0
  %61 = vmatpush1.bf16.msra.mxu0 0
  %62 = vmatprep.subr.bf16.mxu0 0
  %63 = vmatpush1.bf16.msra.mxu0 0
  %64 = vmatprep.subr.bf16.mxu0 0
  %65 = vmatpush1.bf16.msra.mxu0 0
  %66 = vmatprep.subr.bf16.mxu0 0
  %67 = vmatpush1.bf16.msra.mxu0 0
  %68 = vmatprep.subr.bf16.mxu0 0
  %69 = vmatpush1.bf16.msra.mxu0 0
  %70 = vmatprep.subr.bf16.mxu0 0
  %71 = vmatpush1.bf16.msra.mxu0 0
  %72 = vmatprep.subr.bf16.mxu0 %v51
  %73 = vmatpush1.bf16.msra.mxu0 %v50
  %74 = vmatprep.subr.bf16.mxu0 %v49
  %75 = vmatpush1.bf16.msra.mxu0 %v48
  %76 = vmatprep.subr.bf16.mxu0 0
  %77 = vmatpush2.bf16.msra.mxu0 0
  %78 = vmatprep.subr.bf16.mxu0 0
  %79 = vmatpush2.bf16.msra.mxu0 0
  %80 = vmatprep.subr.bf16.mxu0 0
  %81 = vmatpush2.bf16.msra.mxu0 0
  %82 = vmatprep.subr.bf16.mxu0 0
  %83 = vmatpush2.bf16.msra.mxu0 0
  %84 = vmatprep.subr.bf16.mxu0 0
  %85 = vmatpush2.bf16.msra.mxu0 0
  %86 = vmatprep.subr.bf16.mxu0 0
  %87 = vmatpush2.bf16.msra.mxu0 0
  %88 = vmatprep.subr.bf16.mxu0 0
  %89 = vmatpush2.bf16.msra.mxu0 0
  %90 = vmatprep.subr.bf16.mxu0 0
  %91 = vmatpush2.bf16.msra.mxu0 0
  %92 = vmatprep.mubr.bf16.mxu0 0
  %93 = vmatmul.mubr.bf16.gmra.mxu0 %v58
  %v94 = vpop.f32.mrf.mxu0
  %v95 = vadd.f32 0.0, %v94
  %v96 = vpop.f32.mrf.mxu0
  %v97 = vadd.f32 0.0, %v96
  %v98 = vpop.f32.mrf.mxu0
  %v99 = vadd.f32 0.0, %v98
  %v100 = vpop.f32.mrf.mxu0
  %v101 = vadd.f32 0.0, %v100
  %102 = vdwg.mxu0
  %v103 = vadd.f32 %v21, %v95
  %v104 = vadd.f32 %v22, %v97
  %v105 = vadd.f32 %v23, %v99
  %v106 = vadd.f32 %v24, %v101
  %107 = vst [vmem:[#allocation2] sm:$0xff] %v103
  %vm108 = vcmask 523264
  %109 = vst.msk [vmem:[#allocation2 + $0x8] sm:$0xff] %vm108, %v104
  %110 = vst [vmem:[#allocation2 + $0x10] sm:$0xff] %v105
  %111 = vst.msk [vmem:[#allocation2 + $0x18] sm:$0xff] %vm108, %v106
  // Predicated region
  $region14: #{transformer_forward.23} parent=0 // pred_check
    %p112 = pneg %p12
  $region15: #{transformer_forward.23} parent=0 // pred_check_branch
    %114 = sbr.rel (%p112) target = $region17
  $region16: #{transformer_forward.23} parent=0 // pred_region
    %v115 = vld [vmem:[#allocation2] sm:$0xff]
    %v116 = vld [vmem:[#allocation2 + $0x8] sm:$0xff]
    %v117 = vld [vmem:[#allocation2 + $0x10] sm:$0xff]
    %v118 = vld [vmem:[#allocation2 + $0x18] sm:$0xff]
    %119 = vst [vmem:[%s2] sm:$0xff] %v115
    %120 = vst.msk [vmem:[%s2 + $0x8] sm:$0xff] %vm108, %v116
    %121 = vst [vmem:[%s2 + $0x10] sm:$0xff] %v117
    %122 = vst.msk [vmem:[%s2 + $0x18] sm:$0xff] %vm108, %v118
  $region17: #{transformer_forward.23} parent=0 // pred_fallthru
    _
  // Predicated region
  $region18: #{transformer_forward.23} parent=0 // pred_check
    _
  $region19: #{transformer_forward.23} parent=0 // pred_check_branch
    %124 = sbr.rel (0) target = $region21
  $region20: #{transformer_forward.23} parent=0 // pred_region
    _
  $region21: #{transformer_forward.23} parent=0 // pred_fallthru
    _
  // Predicated region
  $region22: #{transformer_forward.23} parent=0 // pred_check
    _
  $region23: #{transformer_forward.23} parent=0 // pred_check_branch
    %126 = sbr.rel (0) target = $region25
  $region24: #{transformer_forward.23} parent=0 // pred_region
    _
  $region25: #{transformer_forward.23} parent=0 // pred_fallthru
    _

// kernel: transformer_forward.25
$region0: #{transformer_forward.25}
  #allocation0 [shape = 'u32[]', space=smem, size = 0x4, offset = 0x4, fixed_abs, tag = 'smem constant byte address 0x4 - core index']
  #allocation1 [shape = 'u32[144,128]{1,0:T(1,128)}', space=vmem, size = 0x12000, scoped, tag = 'internal scratch']
  #allocation2 [shape = 'f32[16,32]{1,0:T(8,128)}', space=vmem, size = 0x2000, scoped, tag = 'scratch operand']
  %s0 = inlined_call_operand.vmem [shape: bf16[16,96], index: 0, kind: input, shape index: {}]
  %s1 = inlined_call_operand.vmem [shape: bf16[96,32], index: 1, kind: input, shape index: {}]
  %s2 = inlined_call_operand.vmem [shape: f32[16,32], index: 2, kind: input, shape index: {}]
  %s3 = inlined_call_operand.vmem [shape: f32[16,32], index: 3, kind: output, shape index: {}]
  %s4 = sld [smem:[#allocation0]]
  $region30: #{transformer_forward.25} parent=0
    _
  %s6 = ssub.s32 1, %s4
  %s7 = scalar_select 0, %s6, %s4
  // Predicated region
  $region2: #{transformer_forward.25} parent=0 // pred_check
    _
  $region3: #{transformer_forward.25} parent=0 // pred_check_branch
    %9 = sbr.rel (0) target = $region5
  $region4: #{transformer_forward.25} parent=0 // pred_region
    _
  $region5: #{transformer_forward.25} parent=0 // pred_fallthru
    _
  // Predicated region
  $region6: #{transformer_forward.25} parent=0 // pred_check
    _
  $region7: #{transformer_forward.25} parent=0 // pred_check_branch
    %11 = sbr.rel (0) target = $region9
  $region8: #{transformer_forward.25} parent=0 // pred_region
    _
  $region9: #{transformer_forward.25} parent=0 // pred_fallthru
    _
  // Predicated region
  $region10: #{transformer_forward.25} parent=0 // pred_check
    _
  $region11: #{transformer_forward.25} parent=0 // pred_check_branch
    %13 = sbr.rel (0) target = $region13
  $region12: #{transformer_forward.25} parent=0 // pred_region
    _
  $region13: #{transformer_forward.25} parent=0 // pred_fallthru
    _
  %p15 = scmp.eq.s32.totalorder 0, 0
  // Predicated region
  $region14: #{transformer_forward.25} parent=0 // pred_check
    %p16 = pneg %p15
  $region15: #{transformer_forward.25} parent=0 // pred_check_branch
    %18 = sbr.rel (%p16) target = $region17
  $region16: #{transformer_forward.25} parent=0 // pred_region
    %v19 = vld [vmem:[%s2] sm:$0xff]
    %v20 = vld [vmem:[%s2 + $0x8] sm:$0xff]
    %vm21 = vcmask 261120
    %22 = vst.msk [vmem:[#allocation2] sm:$0xff] %vm21, %v19
    %23 = vst.msk [vmem:[#allocation2 + $0x8] sm:$0xff] %vm21, %v20
  $region17: #{transformer_forward.25} parent=0 // pred_fallthru
    _
  %v24 = vld [vmem:[#allocation2] sm:$0xff]
  %v25 = vld [vmem:[#allocation2 + $0x8] sm:$0xff]
  %v26 = vld [vmem:[%s0] sm:$0xf]
  %v27 = vld [vmem:[%s0 + $0x4] sm:$0xf]
  %v28 = vld [vmem:[%s1] sm:$0xf]
  %v29 = vld [vmem:[%s1 + $0x4] sm:$0xf]
  %v30 = vld [vmem:[%s1 + $0x8] sm:$0xf]
  %v31 = vld [vmem:[%s1 + $0xc] sm:$0xf]
  %v32 = vld [vmem:[%s1 + $0x10] sm:$0xf]
  %v33 = vld [vmem:[%s1 + $0x14] sm:$0xf]
  %v34 = vld [vmem:[%s1 + $0x18] sm:$0xf]
  %v35 = vld [vmem:[%s1 + $0x1c] sm:$0xf]
  %v36 = vld [vmem:[%s1 + $0x20] sm:$0xf]
  %v37 = vld [vmem:[%s1 + $0x24] sm:$0xf]
  %v38 = vld [vmem:[%s1 + $0x28] sm:$0xf]
  %v39 = vld [vmem:[%s1 + $0x2c] sm:$0xf]
  %v42 = vunpack.c.l.b16 %v26
  %v43 = vunpack.c.l.b16 %v27
  %v44 = vpack.c.b16 %v43, %v42
  %v57 = vunpack.c.l.b16 %v28
  %v58 = vunpack.c.l.b16 %v29
  %v59 = vunpack.c.l.b16 %v30
  %v60 = vunpack.c.l.b16 %v31
  %v61 = vunpack.c.l.b16 %v32
  %v62 = vunpack.c.l.b16 %v33
  %v63 = vunpack.c.l.b16 %v34
  %v64 = vunpack.c.l.b16 %v35
  %v65 = vunpack.c.l.b16 %v36
  %v66 = vunpack.c.l.b16 %v37
  %v67 = vunpack.c.l.b16 %v38
  %v68 = vunpack.c.l.b16 %v39
  %v69 = vpack.c.b16 %v58, %v57
  %v70 = vpack.c.b16 %v60, %v59
  %v71 = vpack.c.b16 %v62, %v61
  %v72 = vpack.c.b16 %v64, %v63
  %v73 = vpack.c.b16 %v66, %v65
  %v74 = vpack.c.b16 %v68, %v67
  %vm81 = vcmask 785408
  %v83 = vsel %vm81, %v44, 0
  %85 = vmatprep.subr.bf16.mxu0 0
  %86 = vmatpush1.bf16.msra.mxu0 0
  %87 = vmatprep.subr.bf16.mxu0 0
  %88 = vmatpush1.bf16.msra.mxu0 0
  %89 = vmatprep.subr.bf16.mxu0 0
  %90 = vmatpush1.bf16.msra.mxu0 %v74
  %91 = vmatprep.subr.bf16.mxu0 0
  %92 = vmatpush1.bf16.msra.mxu0 %v73
  %93 = vmatprep.subr.bf16.mxu0 0
  %94 = vmatpush1.bf16.msra.mxu0 %v72
  %95 = vmatprep.subr.bf16.mxu0 0
  %96 = vmatpush1.bf16.msra.mxu0 %v71
  %97 = vmatprep.subr.bf16.mxu0 0
  %98 = vmatpush1.bf16.msra.mxu0 %v70
  %99 = vmatprep.subr.bf16.mxu0 0
  %100 = vmatpush1.bf16.msra.mxu0 %v69
  %101 = vmatprep.subr.bf16.mxu0 0
  %102 = vmatpush2.bf16.msra.mxu0 0
  %103 = vmatprep.subr.bf16.mxu0 0
  %104 = vmatpush2.bf16.msra.mxu0 0
  %105 = vmatprep.subr.bf16.mxu0 0
  %106 = vmatpush2.bf16.msra.mxu0 0
  %107 = vmatprep.subr.bf16.mxu0 0
  %108 = vmatpush2.bf16.msra.mxu0 0
  %109 = vmatprep.subr.bf16.mxu0 0
  %110 = vmatpush2.bf16.msra.mxu0 0
  %111 = vmatprep.subr.bf16.mxu0 0
  %112 = vmatpush2.bf16.msra.mxu0 0
  %113 = vmatprep.subr.bf16.mxu0 0
  %114 = vmatpush2.bf16.msra.mxu0 0
  %115 = vmatprep.subr.bf16.mxu0 0
  %116 = vmatpush2.bf16.msra.mxu0 0
  %117 = vmatprep.mubr.bf16.mxu0 0
  %118 = vmatmul.mubr.bf16.gmra.mxu0 %v83
  %v119 = vpop.f32.mrf.mxu0
  %v120 = vadd.f32 0.0, %v119
  %v121 = vpop.f32.mrf.mxu0
  %v122 = vpop.f32.mrf.mxu0
  %v123 = vadd.f32 0.0, %v122
  %v124 = vpop.f32.mrf.mxu0
  %125 = vdwg.mxu0
  %v126 = vadd.f32 %v24, %v120
  %v127 = vadd.f32 %v25, %v123
  %vm128 = vcmask 261120
  %129 = vst.msk [vmem:[#allocation2] sm:$0xff] %vm128, %v126
  %130 = vst.msk [vmem:[#allocation2 + $0x8] sm:$0xff] %vm128, %v127
  // Predicated region
  $region18: #{transformer_forward.25} parent=0 // pred_check
    %p131 = pneg %p15
  $region19: #{transformer_forward.25} parent=0 // pred_check_branch
    %133 = sbr.rel (%p131) target = $region21
  $region20: #{transformer_forward.25} parent=0 // pred_region
    %v134 = vld [vmem:[#allocation2] sm:$0xff]
    %v135 = vld [vmem:[#allocation2 + $0x8] sm:$0xff]
    %136 = vst.msk [vmem:[%s3] sm:$0xff] %vm128, %v134
    %137 = vst.msk [vmem:[%s3 + $0x8] sm:$0xff] %vm128, %v135
  $region21: #{transformer_forward.25} parent=0 // pred_fallthru
    _
  // Predicated region
  $region22: #{transformer_forward.25} parent=0 // pred_check
    _
  $region23: #{transformer_forward.25} parent=0 // pred_check_branch
    %139 = sbr.rel (0) target = $region25
  $region24: #{transformer_forward.25} parent=0 // pred_region
    _
  $region25: #{transformer_forward.25} parent=0 // pred_fallthru
    _
  // Predicated region
  $region26: #{transformer_forward.25} parent=0 // pred_check
    _
  $region27: #{transformer_forward.25} parent=0 // pred_check_branch
    %141 = sbr.rel (0) target = $region29
  $region28: #{transformer_forward.25} parent=0 // pred_region
    _
  $region29: #{transformer_forward.25} parent=0 // pred_fallthru
    _

// kernel: transformer_forward.34
$region0: #{transformer_forward.34}
  #allocation0 [shape = 'u32[]', space=smem, size = 0x4, offset = 0x4, fixed_abs, tag = 'smem constant byte address 0x4 - core index']
  #allocation1 [shape = 'u32[144,128]{1,0:T(1,128)}', space=vmem, size = 0x12000, scoped, tag = 'internal scratch']
  %s0 = inlined_call_operand.vmem [shape: f32[2,32], index: 0, kind: input, shape index: {}]
  %s1 = inlined_call_operand.vmem [shape: f32[1,32], index: 1, kind: input, shape index: {}]
  %s2 = inlined_call_operand.vmem [shape: bf16[2,32], index: 2, kind: output, shape index: {}]
  %s3 = sld [smem:[#allocation0]]
  $region18: #{transformer_forward.34} parent=0
    _
  %s5 = ssub.s32 1, %s3
  %s6 = scalar_select 0, %s5, %s3
  // Predicated region
  $region2: #{transformer_forward.34} parent=0 // pred_check
    _
  $region3: #{transformer_forward.34} parent=0 // pred_check_branch
    %8 = sbr.rel (0) target = $region5
  $region4: #{transformer_forward.34} parent=0 // pred_region
    _
  $region5: #{transformer_forward.34} parent=0 // pred_fallthru
    _
  // Predicated region
  $region6: #{transformer_forward.34} parent=0 // pred_check
    _
  $region7: #{transformer_forward.34} parent=0 // pred_check_branch
    %10 = sbr.rel (0) target = $region9
  $region8: #{transformer_forward.34} parent=0 // pred_region
    _
  $region9: #{transformer_forward.34} parent=0 // pred_fallthru
    _
  %v11 = vld [vmem:[%s0] sm:$0x3]
  %v12 = vmul.f32 %v11, %v11
  %vm13 = vcmask 254976
  %v14 = vsel %vm13, %v12, 0.0
  %15 = vadd.xlane.f32.xlu0 %v14
  %v16 = vpop.xlane.xlu0 %15
  %v17 = vrcp.pop 32.0
  %v18 = vmul.f32 %v16, %v17
  %v19 = vadd.f32 %v18, 1e-05
  %v20 = vrsqrt.pop %v19
  %v21 = vmul.f32 %v11, %v20
  %v22 = vld [vmem:[%s1] sm:$0x1]
  %v24 = vlaneseq
  %v25 = vshrl.u32 %v24, 7
  %v26 = vsub.s32 0, %v25
  %v27 = vrot.slane %v22, %v26
  %v29 = vmul.f32 %v21, %v27
  %v30 = vpack.c.bf16 %v29, %v29
  %vm31 = vcmask 253952
  %32 = vst.msk [vmem:[%s2] sm:$0x1] %vm31, %v30
  // Predicated region
  $region10: #{transformer_forward.34} parent=0 // pred_check
    _
  $region11: #{transformer_forward.34} parent=0 // pred_check_branch
    %34 = sbr.rel (0) target = $region13
  $region12: #{transformer_forward.34} parent=0 // pred_region
    _
  $region13: #{transformer_forward.34} parent=0 // pred_fallthru
    _
  // Predicated region
  $region14: #{transformer_forward.34} parent=0 // pred_check
    _
  $region15: #{transformer_forward.34} parent=0 // pred_check_branch
    %36 = sbr.rel (0) target = $region17
  $region16: #{transformer_forward.34} parent=0 // pred_region
    _
  $region17: #{transformer_forward.34} parent=0 // pred_fallthru
    _

// kernel: transformer_forward.35
$region0: #{transformer_forward.35}
  #allocation0 [shape = 'u32[]', space=smem, size = 0x4, offset = 0x4, fixed_abs, tag = 'smem constant byte address 0x4 - core index']
  #allocation1 [shape = 'u32[144,128]{1,0:T(1,128)}', space=vmem, size = 0x12000, scoped, tag = 'internal scratch']
  #allocation2 [shape = 'f32[2,64]{1,0:T(2,128)}', space=vmem, size = 0x400, scoped, tag = 'scratch operand']
  %s0 = inlined_call_operand.vmem [shape: bf16[2,32], index: 0, kind: input, shape index: {}]
  %s1 = inlined_call_operand.vmem [shape: bf16[32,64], index: 1, kind: input, shape index: {}]
  %s2 = inlined_call_operand.hbm [shape: f32[2,64], index: 2, kind: output, shape index: {}]
  %s3 = sld [smem:[#allocation0]]
  $region26: #{transformer_forward.35} parent=0
    _
  %s5 = ssub.s32 1, %s3
  %s6 = scalar_select 0, %s5, %s3
  $region1: #{transformer_forward.35} parent=0
    #allocation3 [shape = 'u8[1024]{0}', space=vmem, size = 0x400, scoped, tag = 'output window, operand 0, single buffered']
    #allocation4 [shape = 's32[1]{0}', space=sflag, size = 0x4, scoped, tag = 'scoped memory for transformer_forward.35']
    %7 = vsyncpa [#allocation4], 0
    // Predicated region
    $region2: #{transformer_forward.35} parent=1 // pred_check
      _
    $region3: #{transformer_forward.35} parent=1 // pred_check_branch
      %9 = sbr.rel (0) target = $region5
    $region4: #{transformer_forward.35} parent=1 // pred_region
      _
    $region5: #{transformer_forward.35} parent=1 // pred_fallthru
      _
    // Predicated region
    $region6: #{transformer_forward.35} parent=1 // pred_check
      _
    $region7: #{transformer_forward.35} parent=1 // pred_check_branch
      %11 = sbr.rel (0) target = $region9
    $region8: #{transformer_forward.35} parent=1 // pred_region
      _
    $region9: #{transformer_forward.35} parent=1 // pred_fallthru
      _
    %p13 = scmp.eq.s32.totalorder 0, 0
    // Predicated region
    $region10: #{transformer_forward.35} parent=1 // pred_check
      %p14 = pneg %p13
    $region11: #{transformer_forward.35} parent=1 // pred_check_branch
      %16 = sbr.rel (%p14) target = $region13
    $region12: #{transformer_forward.35} parent=1 // pred_region
      %vm17 = vcmask 517120
      %18 = vst.msk [vmem:[#allocation2] sm:$0x3] %vm17, 0.0
    $region13: #{transformer_forward.35} parent=1 // pred_fallthru
      _
    %v19 = vld [vmem:[#allocation2] sm:$0x3]
    %v20 = vld [vmem:[%s0] sm:$0x1]
    %v21 = vld [vmem:[%s1] sm:$0xf]
    %v22 = vld [vmem:[%s1 + $0x4] sm:$0xf]
    %v23 = vld [vmem:[%s1 + $0x8] sm:$0xf]
    %v24 = vld [vmem:[%s1 + $0xc] sm:$0xf]
    %v29 = vunpack.c.l.b16 %v21
    %v30 = vunpack.c.l.b16 %v22
    %v31 = vunpack.c.l.b16 %v23
    %v32 = vunpack.c.l.b16 %v24
    %v33 = vpack.c.b16 %v30, %v29
    %v34 = vpack.c.b16 %v32, %v31
    %vm37 = vcmask 261120
    %v39 = vsel %vm37, %v20, 0
    %41 = vmatprep.subr.bf16.mxu0 0
    %42 = vmatpush1.bf16.msra.mxu0 0
    %43 = vmatprep.subr.bf16.mxu0 0
    %44 = vmatpush1.bf16.msra.mxu0 0
    %45 = vmatprep.subr.bf16.mxu0 0
    %46 = vmatpush1.bf16.msra.mxu0 0
    %47 = vmatprep.subr.bf16.mxu0 0
    %48 = vmatpush1.bf16.msra.mxu0 0
    %49 = vmatprep.subr.bf16.mxu0 0
    %50 = vmatpush1.bf16.msra.mxu0 0
    %51 = vmatprep.subr.bf16.mxu0 0
    %52 = vmatpush1.bf16.msra.mxu0 0
    %53 = vmatprep.subr.bf16.mxu0 0
    %54 = vmatpush1.bf16.msra.mxu0 %v34
    %55 = vmatprep.subr.bf16.mxu0 0
    %56 = vmatpush1.bf16.msra.mxu0 %v33
    %57 = vmatprep.subr.bf16.mxu0 0
    %58 = vmatpush2.bf16.msra.mxu0 0
    %59 = vmatprep.subr.bf16.mxu0 0
    %60 = vmatpush2.bf16.msra.mxu0 0
    %61 = vmatprep.subr.bf16.mxu0 0
    %62 = vmatpush2.bf16.msra.mxu0 0
    %63 = vmatprep.subr.bf16.mxu0 0
    %64 = vmatpush2.bf16.msra.mxu0 0
    %65 = vmatprep.subr.bf16.mxu0 0
    %66 = vmatpush2.bf16.msra.mxu0 0
    %67 = vmatprep.subr.bf16.mxu0 0
    %68 = vmatpush2.bf16.msra.mxu0 0
    %69 = vmatprep.subr.bf16.mxu0 0
    %70 = vmatpush2.bf16.msra.mxu0 0
    %71 = vmatprep.subr.bf16.mxu0 0
    %72 = vmatpush2.bf16.msra.mxu0 0
    %73 = vmatprep.mubr.bf16.mxu0 0
    %74 = vmatmul.mubr.bf16.gmra.mxu0 %v39
    %v75 = vpop.f32.mrf.mxu0
    %v76 = vadd.f32 0.0, %v75
    %v77 = vpop.f32.mrf.mxu0
    %v78 = vpop.f32.mrf.mxu0
    %v79 = vpop.f32.mrf.mxu0
    %80 = vdwg.mxu0
    %v81 = vadd.f32 %v19, %v76
    %vm82 = vcmask 517120
    %83 = vst.msk [vmem:[#allocation2] sm:$0x3] %vm82, %v81
    // Predicated region
    $region14: #{transformer_forward.35} parent=1 // pred_check
      %p84 = pneg %p13
    $region15: #{transformer_forward.35} parent=1 // pred_check_branch
      %86 = sbr.rel (%p84) target = $region17
    $region16: #{transformer_forward.35} parent=1 // pred_region
      %v87 = vld [vmem:[#allocation2] sm:$0x3]
      %88 = vst.msk [vmem:[#allocation3] sm:$0x3] %vm82, %v87
    $region17: #{transformer_forward.35} parent=1 // pred_fallthru
      _
    // Predicated region
    $region18: #{transformer_forward.35} parent=1 // pred_check
      _
    $region19: #{transformer_forward.35} parent=1 // pred_check_branch
      %90 = sbr.rel (0) target = $region21
    $region20: #{transformer_forward.35} parent=1 // pred_region
      %s92 = ssub.s32 32, 32
      %93 = vsyncadd [#allocation4], %s92
      %s95 = sshll.u32 [#allocation3], 4
      %s96 = int_to_ptr.vmem [resolvable:$true] %s95
      %98 = dma.vmem_to_hbm [thread:$0]  %s96, 32, %s2, [#allocation4]
    $region21: #{transformer_forward.35} parent=1 // pred_fallthru
      _
    // Predicated region
    $region22: #{transformer_forward.35} parent=1 // pred_check
      _
    $region23: #{transformer_forward.35} parent=1 // pred_check_branch
      %100 = sbr.rel (0) target = $region25
    $region24: #{transformer_forward.35} parent=1 // pred_region
      %101 = dma.done [#allocation4], 32
    $region25: #{transformer_forward.35} parent=1 // pred_fallthru
      _
    %102 = vsyncpa [#allocation4], 1

</llo_original>
